<compile_context>
chip_gen: v5e
topology: v5e:2x2
jax: 0.10.0
libtpu: 0.0.40
codegen_flags: <defaults>
</compile_context>

<pallas_src>
import jax
import jax.numpy as jnp
from jax.experimental import pallas as pl
from jax.experimental.pallas import tpu as pltpu

# ----------------------------- configuration -----------------------------
B = 2        # batch_size (conversations)
T = 6        # turns per conversation (all full -> packing == identity)
S = 16       # tokens per turn (conv[:, 1:])
VOCAB = 50   # vocab_num
VPAD = 128   # vocab padded to 128 -> one clean 128-lane one-hot block per tap
E = 32       # embedding_dim
C = 8        # CNN_kernal_num  -> sent_reps dim = 3*C
H = 16       # conv_hidden_dim
D = 4        # config.d (discourse dims)
K = 8        # config.k (topic dims)
HIST = 5     # history turns

N = T * B            # sentences, (t, b)-major
F = N * S            # flat token rows
F_PAD = F + 8        # tail pad so tap-shifted token slices stay in bounds
H2 = 2 * H           # 32: hidden = [fwd | bwd]
G8 = 4 * H2          # 128: interleaved gate cols [i_f|i_b|f_f|f_b|g_f|g_b|o_f|o_b]
SR = 3 * C           # 24: sentence representation width
EPS = 1e-6

# ---- packed weight slab (built ONCE at model load): f32 [WBUF_R, 128] ----
# every band starts at a sublane-tile-aligned row (multiple of 8), column 0.
R_WF   = 0                 # fused (embedding @ conv-tap) weights [4*VPAD, 3C]
R_BC   = R_WF + 4 * VPAD   # conv bias                            [1, 3C]
R_WINF = R_BC + 8          # LSTM input proj, fwd gate slots      [3C, G8]
R_WINB = R_WINF + SR       # LSTM input proj, bwd gate slots      [3C, G8]
R_BINF = R_WINB + SR       # LSTM input bias, fwd slots           [1, G8]
R_BINB = R_BINF + 8        # LSTM input bias, bwd slots           [1, G8]
R_WHH  = R_BINB + 8        # recurrent weights (block-diagonal)   [H2, G8]
R_WLAB = R_WHH + H2        # hidden2label [w | b]                 [1, H2+K+1]
WBUF_R = R_WLAB + 8

# ---- packed per-call buffer: f32 [DBUF_R, 128] ----
D_H0 = 0     # h0 (fwd|bwd)   [B, H2]
D_C0 = 8     # c0 (fwd|bwd)   [B, H2]
D_CT = 16    # conv topic     [B, K]
D_HT = 24    # history topics [B, HIST*K]
DBUF_R = 32


# ------------------------------ fused kernel ------------------------------
def _fused_kernel(tok_ref, wbuf_ref, dbuf_ref, out_ref):
    f32 = jnp.float32
    tok = tok_ref[...]                                            # [F_PAD, 1] int32

    # ---- embedding lookup + CNN as ONE GEMM --------------------------------
    # The conv is linear in the embedding, so the embedding table is folded
    # into the tap weights at pack time: wfused[dh*VPAD + v] = embtab[v] @ tap[dh].
    # LHS = lane-concat of the 4 tap-shifted one-hots -> single K=512 GEMM.
    lane_v = jax.lax.broadcasted_iota(jnp.int32, (F, VPAD), 1)
    oh = jnp.concatenate(
        [(tok[dh:dh + F, :] == lane_v).astype(f32) for dh in range(4)],
        axis=1)                                                   # [F, 4*VPAD]
    wfused = wbuf_ref[R_WF:R_WF + 4 * VPAD, 0:SR]                 # [512, 3C]
    bc = wbuf_ref[R_BC:R_BC + 1, 0:SR]                            # [1, 3C]
    acc = jnp.maximum(
        jnp.dot(oh, wfused, preferred_element_type=f32) + bc, 0.0)  # ReLU(conv+b)

    # masked max-pool over time (per sentence, per filter-height block).
    # 0.0 fill is safe only because ReLU guarantees non-negative activations.
    acc3 = acc.reshape(N, S, SR)
    l_idx = jax.lax.broadcasted_iota(jnp.int32, (1, S, SR), 1)
    c_idx = jax.lax.broadcasted_iota(jnp.int32, (1, S, SR), 2)
    max_l = (S - 2) - (c_idx >= C).astype(jnp.int32) - (c_idx >= 2 * C).astype(jnp.int32)
    sent = jnp.max(jnp.where(l_idx <= max_l, acc3, 0.0), axis=1)  # [N, 3C]

    # ---- bidirectional LSTM over turns -------------------------------------
    # single fused input projection for both directions -> [N, 256]
    w_in = jnp.concatenate([wbuf_ref[R_WINF:R_WINF + SR, :],
                            wbuf_ref[R_WINB:R_WINB + SR, :]], axis=1)   # [3C, 256]
    b_in = jnp.concatenate([wbuf_ref[R_BINF:R_BINF + 1, :],
                            wbuf_ref[R_BINB:R_BINB + 1, :]], axis=1)    # [1, 256]
    xg = jnp.dot(sent, w_in, preferred_element_type=f32) + b_in         # [N, 256]

    # hoist the backward-direction time reversal and the per-step add out of
    # the serial recurrence: step t uses fwd slots at t + bwd slots at T-1-t.
    xg_step = [xg[t * B:(t + 1) * B, 0:G8]
               + xg[(T - 1 - t) * B:(T - t) * B, G8:2 * G8]
               for t in range(T)]

    whh = wbuf_ref[R_WHH:R_WHH + H2, :]                   # [H2, G8], loaded once
    h2 = dbuf_ref[D_H0:D_H0 + B, 0:H2]                    # cols 0:H fwd, H:2H bwd
    c2 = dbuf_ref[D_C0:D_C0 + B, 0:H2]
    for t in range(T):
        gates = jnp.dot(h2, whh, preferred_element_type=f32) + xg_step[t]  # [B, G8]
        i2 = jax.nn.sigmoid(gates[:, 0 * H2:1 * H2])
        f2 = jax.nn.sigmoid(gates[:, 1 * H2:2 * H2])
        g2 = jnp.tanh(gates[:, 2 * H2:3 * H2])
        o2 = jax.nn.sigmoid(gates[:, 3 * H2:4 * H2])
        c2 = f2 * c2 + i2 * g2
        h2 = o2 * jnp.tanh(c2)

    # query_turn = cat([h_n[-1] (backward), h_n[-2] (forward)], dim=1)
    query = jnp.concatenate([h2[:, H:H2], h2[:, 0:H]], axis=1)            # [B, 2H]

    # ---- topic attention head (cosine-sim softmax, unrolled over history) ----
    ct = dbuf_ref[D_CT:D_CT + B, 0:K]                                     # [B, K]
    n1 = jnp.sqrt(jnp.sum(ct * ct, axis=1, keepdims=True))                # [B, 1]
    sims, ht_js = [], []
    for j in range(HIST):
        ht_j = dbuf_ref[D_HT:D_HT + B, j * K:(j + 1) * K]                 # [B, K]
        ht_js.append(ht_j)
        n2_j = jnp.sqrt(jnp.sum(ht_j * ht_j, axis=1, keepdims=True))
        dot_j = jnp.sum(ct * ht_j, axis=1, keepdims=True)
        # torch cosine_similarity: dot / max(|a|*|b|, eps), eps = 1e-6
        sims.append(dot_j / jnp.maximum(n1 * n2_j, EPS))
    sim = jnp.concatenate(sims, axis=1)                                   # [B, HIST]
    m = jnp.max(sim, axis=1, keepdims=True)
    e = jnp.exp(sim - m)
    w = e / jnp.sum(e, axis=1, keepdims=True)                             # exact division
    att = w[:, 0:1] * ht_js[0]
    for j in range(1, HIST):
        att = att + w[:, j:j + 1] * ht_js[j]                              # [B, K]

    # ---- hidden2label as VPU multiply + lane reduce (bias via ones column) ----
    ones = jnp.ones((B, 1), f32)
    final = jnp.concatenate([query, att, ones], axis=1)                   # [B, 2H+K+1]
    wlab = wbuf_ref[R_WLAB:R_WLAB + 1, 0:H2 + K + 1]                      # [1, 2H+K+1]
    logit = jnp.sum(final * wlab, axis=1, keepdims=True)                  # [B, 1]
    out_ref[...] = jax.nn.sigmoid(logit)


# --------------------------- one-time weight packing ---------------------------
def _interleave_cols(w4h, forward):
    """[rows, 4H] gate-order (i,f,g,o) -> [rows, 8H]: forward weights land in the
    first H cols of each 2H gate block, backward in the second H cols."""
    rows = w4h.shape[0]
    w = w4h.reshape(rows, 4, H)
    z = jnp.zeros_like(w)
    parts = (w, z) if forward else (z, w)
    return jnp.stack(parts, axis=2).reshape(rows, 8 * H)


def pack_weights(params):
    """Model-load-time packing of ALL parameters into a single f32 slab; the
    per-call path never repacks weights (perf review item 11)."""
    # embedding table padded to VPAD rows (padding_idx row 0 stays zero)
    embtab = jnp.zeros((VPAD, E), jnp.float32).at[:VOCAB].set(params["embedding"])
    # conv taps [4, E, 3C]; taps beyond each filter height stay zero
    wc = jnp.zeros((4, E, SR), jnp.float32)
    wc = wc.at[0:2, :, 0 * C:1 * C].set(jnp.transpose(params["conv_w2"], (1, 2, 0)))
    wc = wc.at[0:3, :, 1 * C:2 * C].set(jnp.transpose(params["conv_w3"], (1, 2, 0)))
    wc = wc.at[0:4, :, 2 * C:3 * C].set(jnp.transpose(params["conv_w4"], (1, 2, 0)))
    # fold embedding into the conv: wfused[dh*VPAD + v] = embtab[v] @ wc[dh]
    wfused = jnp.einsum("ve,dec->dvc", embtab, wc).reshape(4 * VPAD, SR)
    bc = jnp.concatenate([params["conv_b2"], params["conv_b3"],
                          params["conv_b4"]]).reshape(1, SR)

    w_in_f = _interleave_cols(params["w_ih_f"].T, True)        # [3C, G8]
    w_in_b = _interleave_cols(params["w_ih_b"].T, False)       # [3C, G8]
    whh = jnp.concatenate([_interleave_cols(params["w_hh_f"].T, True),
                           _interleave_cols(params["w_hh_b"].T, False)], axis=0)
    b_in_f = _interleave_cols((params["b_ih_f"] + params["b_hh_f"]).reshape(1, 4 * H), True)
    b_in_b = _interleave_cols((params["b_ih_b"] + params["b_hh_b"]).reshape(1, 4 * H), False)
    wlab = jnp.concatenate([params["w_label"].reshape(1, H2 + K),
                            params["b_label"].reshape(1, 1)], axis=1)

    wbuf = jnp.zeros((WBUF_R, G8), jnp.float32)
    wbuf = wbuf.at[R_WF:R_WF + 4 * VPAD, 0:SR].set(wfused)
    wbuf = wbuf.at[R_BC:R_BC + 1, 0:SR].set(bc)
    wbuf = wbuf.at[R_WINF:R_WINF + SR, :].set(w_in_f)
    wbuf = wbuf.at[R_WINB:R_WINB + SR, :].set(w_in_b)
    wbuf = wbuf.at[R_BINF:R_BINF + 1, :].set(b_in_f)
    wbuf = wbuf.at[R_BINB:R_BINB + 1, :].set(b_in_b)
    wbuf = wbuf.at[R_WHH:R_WHH + H2, :].set(whh)
    wbuf = wbuf.at[R_WLAB:R_WLAB + 1, 0:H2 + K + 1].set(wlab)
    return wbuf


# ------------------------------ per-call wrapper ------------------------------
def _pack_dynamic(convs, conv_TDvecs, history_TDvecs, h0, c0):
    # tokens in (t, b)-major sentence order, flattened, tail-padded with id 0
    tokens = jnp.transpose(convs[:, :, 1:], (1, 0, 2)).reshape(F)
    tok = jnp.zeros((F_PAD, 1), jnp.int32).at[:F, 0].set(tokens)

    dbuf = jnp.zeros((DBUF_R, G8), jnp.float32)
    dbuf = dbuf.at[D_H0:D_H0 + B, 0:H2].set(jnp.concatenate([h0[0], h0[1]], axis=1))
    dbuf = dbuf.at[D_C0:D_C0 + B, 0:H2].set(jnp.concatenate([c0[0], c0[1]], axis=1))
    dbuf = dbuf.at[D_CT:D_CT + B, 0:K].set(conv_TDvecs[:, 0, D:])
    dbuf = dbuf.at[D_HT:D_HT + B, 0:HIST * K].set(
        history_TDvecs[:, :, D:].reshape(B, HIST * K))
    return tok, dbuf


def lstm_tdm_forward(wbuf, convs, conv_TDvecs, history_TDvecs, h0, c0):
    # TODO(synk): dd_att / topic_init / disc_lstm / use_LSTM(GRU) branches of
    # LSTMTDM are not exercised by this configuration and are not implemented.
    tok, dbuf = _pack_dynamic(convs, conv_TDvecs, history_TDvecs, h0, c0)
    vmem = lambda: pl.BlockSpec(memory_space=pltpu.MemorySpace.VMEM)
    out = pl.pallas_call(
        _fused_kernel,
        in_specs=[vmem(), vmem(), vmem()],
        out_specs=vmem(),
        out_shape=jax.ShapeDtypeStruct((B, 1), jnp.float32),
    )(tok, wbuf, dbuf)
    return out.reshape(B)


# ---------------------------- parameter init -------------------------------
def init_params(key):
    ks = jax.random.split(key, 20)

    def n(k, shape, scale=0.1):
        return scale * jax.random.normal(k, shape, dtype=jnp.float32)

    emb_tab = n(ks[0], (VOCAB, E)).at[0].set(0.0)            # padding_idx = 0
    return dict(
        embedding=emb_tab,
        # CNNEncoder: Conv2d(1, C, (h, E)) weights stored as [C, h, E]
        conv_w2=n(ks[1], (C, 2, E)), conv_b2=n(ks[2], (C,)),
        conv_w3=n(ks[3], (C, 3, E)), conv_b3=n(ks[4], (C,)),
        conv_w4=n(ks[5], (C, 4, E)), conv_b4=n(ks[6], (C,)),
        # conv_lstm: bidirectional LSTM(3C -> H), gate order i,f,g,o
        w_ih_f=n(ks[7], (4 * H, 3 * C)), w_hh_f=n(ks[8], (4 * H, H)),
        b_ih_f=n(ks[9], (4 * H,)), b_hh_f=n(ks[10], (4 * H,)),
        w_ih_b=n(ks[11], (4 * H, 3 * C)), w_hh_b=n(ks[12], (4 * H, H)),
        b_ih_b=n(ks[13], (4 * H,)), b_hh_b=n(ks[14], (4 * H,)),
        # hidden2label: Linear(2H + K, 1)
        w_label=n(ks[15], (1, 2 * H + K)), b_label=n(ks[16], (1,)),
    )


if __name__ == "__main__":
    key = jax.random.PRNGKey(0)
    k_tok, k_td, k_hist, k_param, k_h0, k_c0 = jax.random.split(key, 6)

    # convs: [B, T, 1+S] int tokens; all ids >= 1 so every turn counts.
    convs = jax.random.randint(k_tok, (B, T, 1 + S), 1, VOCAB, dtype=jnp.int32)
    conv_TDvecs = jax.random.normal(k_td, (B, T, D + K), dtype=jnp.float32)
    history_TDvecs = jax.random.normal(k_hist, (B, HIST, D + K), dtype=jnp.float32)

    params = init_params(k_param)
    # init_hidden: torch.randn(2*num_layer, B, H) for both h0 and c0
    h0 = jax.random.normal(k_h0, (2, B, H), dtype=jnp.float32)
    c0 = jax.random.normal(k_c0, (2, B, H), dtype=jnp.float32)

    wbuf = pack_weights(params)              # one-time model-load packing
    fwd = jax.jit(lstm_tdm_forward)
    labels = fwd(wbuf, convs, conv_TDvecs, history_TDvecs, h0, c0)
    labels = jax.block_until_ready(labels)
    assert labels.shape == (B,)
    assert bool(jnp.all(jnp.isfinite(labels)))
    print("KERNEL_OK")
</pallas_src>

<mosaic_0001>
module attributes {stable_mosaic.version = 11 : i64} {
  func.func @_fused_kernel(%arg0: memref<200x1xi32, #tpu.memory_space<vmem>>, %arg1: memref<624x128xf32, #tpu.memory_space<vmem>>, %arg2: memref<32x128xf32, #tpu.memory_space<vmem>>, %arg3: memref<2x1xf32, #tpu.memory_space<vmem>>) attributes {dimension_semantics = [], scalar_prefetch = 0 : i64, scratch_operands = 0 : i64, tpu.core_type = #tpu.core_type<tc>} {
    %c0 = arith.constant 0 : index
    %c0_0 = arith.constant 0 : index
    %0 = vector.load %arg0[%c0, %c0_0] : memref<200x1xi32, #tpu.memory_space<vmem>>, vector<200x1xi32>
    %1 = tpu.iota {dimensions = array<i32: 1>} : vector<192x128xi32>
    %2 = vector.extract_strided_slice %0 {offsets = [0, 0], sizes = [192, 1], strides = [1, 1]} : vector<200x1xi32> to vector<192x1xi32>
    %3 = vector.broadcast %2 : vector<192x1xi32> to vector<192x128xi32>
    %4 = arith.cmpi eq, %3, %1 : vector<192x128xi32>
    %5 = arith.extui %4 : vector<192x128xi1> to vector<192x128xi32>
    %6 = arith.sitofp %5 : vector<192x128xi32> to vector<192x128xf32>
    %7 = vector.extract_strided_slice %0 {offsets = [1, 0], sizes = [192, 1], strides = [1, 1]} : vector<200x1xi32> to vector<192x1xi32>
    %8 = vector.broadcast %7 : vector<192x1xi32> to vector<192x128xi32>
    %9 = arith.cmpi eq, %8, %1 : vector<192x128xi32>
    %10 = arith.extui %9 : vector<192x128xi1> to vector<192x128xi32>
    %11 = arith.sitofp %10 : vector<192x128xi32> to vector<192x128xf32>
    %12 = vector.extract_strided_slice %0 {offsets = [2, 0], sizes = [192, 1], strides = [1, 1]} : vector<200x1xi32> to vector<192x1xi32>
    %13 = vector.broadcast %12 : vector<192x1xi32> to vector<192x128xi32>
    %14 = arith.cmpi eq, %13, %1 : vector<192x128xi32>
    %15 = arith.extui %14 : vector<192x128xi1> to vector<192x128xi32>
    %16 = arith.sitofp %15 : vector<192x128xi32> to vector<192x128xf32>
    %17 = vector.extract_strided_slice %0 {offsets = [3, 0], sizes = [192, 1], strides = [1, 1]} : vector<200x1xi32> to vector<192x1xi32>
    %18 = vector.broadcast %17 : vector<192x1xi32> to vector<192x128xi32>
    %19 = arith.cmpi eq, %18, %1 : vector<192x128xi32>
    %20 = arith.extui %19 : vector<192x128xi1> to vector<192x128xi32>
    %21 = arith.sitofp %20 : vector<192x128xi32> to vector<192x128xf32>
    %22 = tpu.concatenate %6, %11, %16, %21 in 1 : vector<192x128xf32>, vector<192x128xf32>, vector<192x128xf32>, vector<192x128xf32> -> vector<192x512xf32>
    %c0_1 = arith.constant 0 : index
    %c0_2 = arith.constant 0 : index
    %23 = vector.load %arg1[%c0_1, %c0_2] : memref<624x128xf32, #tpu.memory_space<vmem>>, vector<512x24xf32>
    %c512 = arith.constant 512 : index
    %c0_3 = arith.constant 0 : index
    %24 = vector.load %arg1[%c512, %c0_3] : memref<624x128xf32, #tpu.memory_space<vmem>>, vector<1x24xf32>
    %cst = arith.constant dense<0.000000e+00> : vector<192x24xf32>
    %25 = tpu.matmul %22, %23, %cst {dimension_numbers = #tpu.dot_dimension_numbers<[1], [0], [0], [1], [0, 0, 1, 1], [], []>} : vector<192x512xf32>, vector<512x24xf32>, vector<192x24xf32> -> vector<192x24xf32>
    %26 = vector.broadcast %24 : vector<1x24xf32> to vector<192x24xf32>
    %27 = arith.addf %25, %26 : vector<192x24xf32>
    %cst_4 = arith.constant 0.000000e+00 : f32
    %28 = vector.broadcast %cst_4 : f32 to vector<192x24xf32>
    %29 = arith.maximumf %27, %28 : vector<192x24xf32>
    %30 = vector.shape_cast %29 : vector<192x24xf32> to vector<12x16x24xf32>
    %31 = tpu.iota {dimensions = array<i32: 1>} : vector<1x16x24xi32>
    %32 = tpu.iota {dimensions = array<i32: 2>} : vector<1x16x24xi32>
    %c8_i32 = arith.constant 8 : i32
    %33 = vector.broadcast %c8_i32 : i32 to vector<1x16x24xi32>
    %34 = arith.cmpi sge, %32, %33 : vector<1x16x24xi32>
    %35 = arith.extui %34 : vector<1x16x24xi1> to vector<1x16x24xi32>
    %c14_i32 = arith.constant 14 : i32
    %36 = vector.broadcast %c14_i32 : i32 to vector<1x16x24xi32>
    %37 = arith.subi %36, %35 : vector<1x16x24xi32>
    %c16_i32 = arith.constant 16 : i32
    %38 = vector.broadcast %c16_i32 : i32 to vector<1x16x24xi32>
    %39 = arith.cmpi sge, %32, %38 : vector<1x16x24xi32>
    %40 = arith.extui %39 : vector<1x16x24xi1> to vector<1x16x24xi32>
    %41 = arith.subi %37, %40 : vector<1x16x24xi32>
    %42 = arith.cmpi sle, %31, %41 : vector<1x16x24xi32>
    %cst_5 = arith.constant 0.000000e+00 : f32
    %43 = vector.shape_cast %42 : vector<1x16x24xi1> to vector<1x16x24xi1>
    %44 = vector.broadcast %43 : vector<1x16x24xi1> to vector<12x16x24xi1>
    %45 = vector.broadcast %cst_5 : f32 to vector<12x16x24xf32>
    %46 = arith.select %44, %30, %45 : vector<12x16x24xi1>, vector<12x16x24xf32>
    %cst_6 = arith.constant dense<0xFF800000> : vector<12x24xf32>
    %47 = vector.multi_reduction <maximumf>, %46, %cst_6 [1] : vector<12x16x24xf32> to vector<12x24xf32>
    %c520 = arith.constant 520 : index
    %c0_7 = arith.constant 0 : index
    %48 = vector.load %arg1[%c520, %c0_7] : memref<624x128xf32, #tpu.memory_space<vmem>>, vector<24x128xf32>
    %c544 = arith.constant 544 : index
    %c0_8 = arith.constant 0 : index
    %49 = vector.load %arg1[%c544, %c0_8] : memref<624x128xf32, #tpu.memory_space<vmem>>, vector<24x128xf32>
    %50 = tpu.concatenate %48, %49 in 1 : vector<24x128xf32>, vector<24x128xf32> -> vector<24x256xf32>
    %c568 = arith.constant 568 : index
    %c0_9 = arith.constant 0 : index
    %51 = vector.load %arg1[%c568, %c0_9] : memref<624x128xf32, #tpu.memory_space<vmem>>, vector<1x128xf32>
    %c576 = arith.constant 576 : index
    %c0_10 = arith.constant 0 : index
    %52 = vector.load %arg1[%c576, %c0_10] : memref<624x128xf32, #tpu.memory_space<vmem>>, vector<1x128xf32>
    %53 = tpu.concatenate %51, %52 in 1 : vector<1x128xf32>, vector<1x128xf32> -> vector<1x256xf32>
    %cst_11 = arith.constant dense<0.000000e+00> : vector<12x256xf32>
    %54 = tpu.matmul %47, %50, %cst_11 {dimension_numbers = #tpu.dot_dimension_numbers<[1], [0], [0], [1], [0, 0, 1, 1], [], []>} : vector<12x24xf32>, vector<24x256xf32>, vector<12x256xf32> -> vector<12x256xf32>
    %55 = vector.broadcast %53 : vector<1x256xf32> to vector<12x256xf32>
    %56 = arith.addf %54, %55 : vector<12x256xf32>
    %57 = vector.extract_strided_slice %56 {offsets = [0, 0], sizes = [2, 128], strides = [1, 1]} : vector<12x256xf32> to vector<2x128xf32>
    %58 = vector.extract_strided_slice %56 {offsets = [10, 128], sizes = [2, 128], strides = [1, 1]} : vector<12x256xf32> to vector<2x128xf32>
    %59 = arith.addf %57, %58 : vector<2x128xf32>
    %60 = vector.extract_strided_slice %56 {offsets = [2, 0], sizes = [2, 128], strides = [1, 1]} : vector<12x256xf32> to vector<2x128xf32>
    %61 = vector.extract_strided_slice %56 {offsets = [8, 128], sizes = [2, 128], strides = [1, 1]} : vector<12x256xf32> to vector<2x128xf32>
    %62 = arith.addf %60, %61 : vector<2x128xf32>
    %63 = vector.extract_strided_slice %56 {offsets = [4, 0], sizes = [2, 128], strides = [1, 1]} : vector<12x256xf32> to vector<2x128xf32>
    %64 = vector.extract_strided_slice %56 {offsets = [6, 128], sizes = [2, 128], strides = [1, 1]} : vector<12x256xf32> to vector<2x128xf32>
    %65 = arith.addf %63, %64 : vector<2x128xf32>
    %66 = vector.extract_strided_slice %56 {offsets = [6, 0], sizes = [2, 128], strides = [1, 1]} : vector<12x256xf32> to vector<2x128xf32>
    %67 = vector.extract_strided_slice %56 {offsets = [4, 128], sizes = [2, 128], strides = [1, 1]} : vector<12x256xf32> to vector<2x128xf32>
    %68 = arith.addf %66, %67 : vector<2x128xf32>
    %69 = vector.extract_strided_slice %56 {offsets = [8, 0], sizes = [2, 128], strides = [1, 1]} : vector<12x256xf32> to vector<2x128xf32>
    %70 = vector.extract_strided_slice %56 {offsets = [2, 128], sizes = [2, 128], strides = [1, 1]} : vector<12x256xf32> to vector<2x128xf32>
    %71 = arith.addf %69, %70 : vector<2x128xf32>
    %72 = vector.extract_strided_slice %56 {offsets = [10, 0], sizes = [2, 128], strides = [1, 1]} : vector<12x256xf32> to vector<2x128xf32>
    %73 = vector.extract_strided_slice %56 {offsets = [0, 128], sizes = [2, 128], strides = [1, 1]} : vector<12x256xf32> to vector<2x128xf32>
    %74 = arith.addf %72, %73 : vector<2x128xf32>
    %c584 = arith.constant 584 : index
    %c0_12 = arith.constant 0 : index
    %75 = vector.load %arg1[%c584, %c0_12] : memref<624x128xf32, #tpu.memory_space<vmem>>, vector<32x128xf32>
    %c0_13 = arith.constant 0 : index
    %c0_14 = arith.constant 0 : index
    %76 = vector.load %arg2[%c0_13, %c0_14] : memref<32x128xf32, #tpu.memory_space<vmem>>, vector<2x32xf32>
    %c8 = arith.constant 8 : index
    %c0_15 = arith.constant 0 : index
    %77 = vector.load %arg2[%c8, %c0_15] : memref<32x128xf32, #tpu.memory_space<vmem>>, vector<2x32xf32>
    %cst_16 = arith.constant dense<0.000000e+00> : vector<2x128xf32>
    %78 = tpu.matmul %76, %75, %cst_16 {dimension_numbers = #tpu.dot_dimension_numbers<[1], [0], [0], [1], [0, 0, 1, 1], [], []>} : vector<2x32xf32>, vector<32x128xf32>, vector<2x128xf32> -> vector<2x128xf32>
    %79 = arith.addf %78, %59 : vector<2x128xf32>
    %80 = vector.extract_strided_slice %79 {offsets = [0, 0], sizes = [2, 32], strides = [1, 1]} : vector<2x128xf32> to vector<2x32xf32>
    %81 = arith.negf %80 : vector<2x32xf32>
    %82 = math.exp %81 : vector<2x32xf32>
    %cst_17 = arith.constant 1.000000e+00 : f32
    %83 = vector.broadcast %cst_17 : f32 to vector<2x32xf32>
    %84 = arith.addf %83, %82 : vector<2x32xf32>
    %85 = arith.divf %83, %84 : vector<2x32xf32>
    %86 = vector.extract_strided_slice %79 {offsets = [0, 32], sizes = [2, 32], strides = [1, 1]} : vector<2x128xf32> to vector<2x32xf32>
    %87 = arith.negf %86 : vector<2x32xf32>
    %88 = math.exp %87 : vector<2x32xf32>
    %cst_18 = arith.constant 1.000000e+00 : f32
    %89 = vector.broadcast %cst_18 : f32 to vector<2x32xf32>
    %90 = arith.addf %89, %88 : vector<2x32xf32>
    %91 = arith.divf %89, %90 : vector<2x32xf32>
    %92 = vector.extract_strided_slice %79 {offsets = [0, 64], sizes = [2, 32], strides = [1, 1]} : vector<2x128xf32> to vector<2x32xf32>
    %93 = math.tanh %92 : vector<2x32xf32>
    %94 = vector.extract_strided_slice %79 {offsets = [0, 96], sizes = [2, 32], strides = [1, 1]} : vector<2x128xf32> to vector<2x32xf32>
    %95 = arith.negf %94 : vector<2x32xf32>
    %96 = math.exp %95 : vector<2x32xf32>
    %cst_19 = arith.constant 1.000000e+00 : f32
    %97 = vector.broadcast %cst_19 : f32 to vector<2x32xf32>
    %98 = arith.addf %97, %96 : vector<2x32xf32>
    %99 = arith.divf %97, %98 : vector<2x32xf32>
    %100 = arith.mulf %91, %77 : vector<2x32xf32>
    %101 = arith.mulf %85, %93 : vector<2x32xf32>
    %102 = arith.addf %100, %101 : vector<2x32xf32>
    %103 = math.tanh %102 : vector<2x32xf32>
    %104 = arith.mulf %99, %103 : vector<2x32xf32>
    %cst_20 = arith.constant dense<0.000000e+00> : vector<2x128xf32>
    %105 = tpu.matmul %104, %75, %cst_20 {dimension_numbers = #tpu.dot_dimension_numbers<[1], [0], [0], [1], [0, 0, 1, 1], [], []>} : vector<2x32xf32>, vector<32x128xf32>, vector<2x128xf32> -> vector<2x128xf32>
    %106 = arith.addf %105, %62 : vector<2x128xf32>
    %107 = vector.extract_strided_slice %106 {offsets = [0, 0], sizes = [2, 32], strides = [1, 1]} : vector<2x128xf32> to vector<2x32xf32>
    %108 = arith.negf %107 : vector<2x32xf32>
    %109 = math.exp %108 : vector<2x32xf32>
    %cst_21 = arith.constant 1.000000e+00 : f32
    %110 = vector.broadcast %cst_21 : f32 to vector<2x32xf32>
    %111 = arith.addf %110, %109 : vector<2x32xf32>
    %112 = arith.divf %110, %111 : vector<2x32xf32>
    %113 = vector.extract_strided_slice %106 {offsets = [0, 32], sizes = [2, 32], strides = [1, 1]} : vector<2x128xf32> to vector<2x32xf32>
    %114 = arith.negf %113 : vector<2x32xf32>
    %115 = math.exp %114 : vector<2x32xf32>
    %cst_22 = arith.constant 1.000000e+00 : f32
    %116 = vector.broadcast %cst_22 : f32 to vector<2x32xf32>
    %117 = arith.addf %116, %115 : vector<2x32xf32>
    %118 = arith.divf %116, %117 : vector<2x32xf32>
    %119 = vector.extract_strided_slice %106 {offsets = [0, 64], sizes = [2, 32], strides = [1, 1]} : vector<2x128xf32> to vector<2x32xf32>
    %120 = math.tanh %119 : vector<2x32xf32>
    %121 = vector.extract_strided_slice %106 {offsets = [0, 96], sizes = [2, 32], strides = [1, 1]} : vector<2x128xf32> to vector<2x32xf32>
    %122 = arith.negf %121 : vector<2x32xf32>
    %123 = math.exp %122 : vector<2x32xf32>
    %cst_23 = arith.constant 1.000000e+00 : f32
    %124 = vector.broadcast %cst_23 : f32 to vector<2x32xf32>
    %125 = arith.addf %124, %123 : vector<2x32xf32>
    %126 = arith.divf %124, %125 : vector<2x32xf32>
    %127 = arith.mulf %118, %102 : vector<2x32xf32>
    %128 = arith.mulf %112, %120 : vector<2x32xf32>
    %129 = arith.addf %127, %128 : vector<2x32xf32>
    %130 = math.tanh %129 : vector<2x32xf32>
    %131 = arith.mulf %126, %130 : vector<2x32xf32>
    %cst_24 = arith.constant dense<0.000000e+00> : vector<2x128xf32>
    %132 = tpu.matmul %131, %75, %cst_24 {dimension_numbers = #tpu.dot_dimension_numbers<[1], [0], [0], [1], [0, 0, 1, 1], [], []>} : vector<2x32xf32>, vector<32x128xf32>, vector<2x128xf32> -> vector<2x128xf32>
    %133 = arith.addf %132, %65 : vector<2x128xf32>
    %134 = vector.extract_strided_slice %133 {offsets = [0, 0], sizes = [2, 32], strides = [1, 1]} : vector<2x128xf32> to vector<2x32xf32>
    %135 = arith.negf %134 : vector<2x32xf32>
    %136 = math.exp %135 : vector<2x32xf32>
    %cst_25 = arith.constant 1.000000e+00 : f32
    %137 = vector.broadcast %cst_25 : f32 to vector<2x32xf32>
    %138 = arith.addf %137, %136 : vector<2x32xf32>
    %139 = arith.divf %137, %138 : vector<2x32xf32>
    %140 = vector.extract_strided_slice %133 {offsets = [0, 32], sizes = [2, 32], strides = [1, 1]} : vector<2x128xf32> to vector<2x32xf32>
    %141 = arith.negf %140 : vector<2x32xf32>
    %142 = math.exp %141 : vector<2x32xf32>
    %cst_26 = arith.constant 1.000000e+00 : f32
    %143 = vector.broadcast %cst_26 : f32 to vector<2x32xf32>
    %144 = arith.addf %143, %142 : vector<2x32xf32>
    %145 = arith.divf %143, %144 : vector<2x32xf32>
    %146 = vector.extract_strided_slice %133 {offsets = [0, 64], sizes = [2, 32], strides = [1, 1]} : vector<2x128xf32> to vector<2x32xf32>
    %147 = math.tanh %146 : vector<2x32xf32>
    %148 = vector.extract_strided_slice %133 {offsets = [0, 96], sizes = [2, 32], strides = [1, 1]} : vector<2x128xf32> to vector<2x32xf32>
    %149 = arith.negf %148 : vector<2x32xf32>
    %150 = math.exp %149 : vector<2x32xf32>
    %cst_27 = arith.constant 1.000000e+00 : f32
    %151 = vector.broadcast %cst_27 : f32 to vector<2x32xf32>
    %152 = arith.addf %151, %150 : vector<2x32xf32>
    %153 = arith.divf %151, %152 : vector<2x32xf32>
    %154 = arith.mulf %145, %129 : vector<2x32xf32>
    %155 = arith.mulf %139, %147 : vector<2x32xf32>
    %156 = arith.addf %154, %155 : vector<2x32xf32>
    %157 = math.tanh %156 : vector<2x32xf32>
    %158 = arith.mulf %153, %157 : vector<2x32xf32>
    %cst_28 = arith.constant dense<0.000000e+00> : vector<2x128xf32>
    %159 = tpu.matmul %158, %75, %cst_28 {dimension_numbers = #tpu.dot_dimension_numbers<[1], [0], [0], [1], [0, 0, 1, 1], [], []>} : vector<2x32xf32>, vector<32x128xf32>, vector<2x128xf32> -> vector<2x128xf32>
    %160 = arith.addf %159, %68 : vector<2x128xf32>
    %161 = vector.extract_strided_slice %160 {offsets = [0, 0], sizes = [2, 32], strides = [1, 1]} : vector<2x128xf32> to vector<2x32xf32>
    %162 = arith.negf %161 : vector<2x32xf32>
    %163 = math.exp %162 : vector<2x32xf32>
    %cst_29 = arith.constant 1.000000e+00 : f32
    %164 = vector.broadcast %cst_29 : f32 to vector<2x32xf32>
    %165 = arith.addf %164, %163 : vector<2x32xf32>
    %166 = arith.divf %164, %165 : vector<2x32xf32>
    %167 = vector.extract_strided_slice %160 {offsets = [0, 32], sizes = [2, 32], strides = [1, 1]} : vector<2x128xf32> to vector<2x32xf32>
    %168 = arith.negf %167 : vector<2x32xf32>
    %169 = math.exp %168 : vector<2x32xf32>
    %cst_30 = arith.constant 1.000000e+00 : f32
    %170 = vector.broadcast %cst_30 : f32 to vector<2x32xf32>
    %171 = arith.addf %170, %169 : vector<2x32xf32>
    %172 = arith.divf %170, %171 : vector<2x32xf32>
    %173 = vector.extract_strided_slice %160 {offsets = [0, 64], sizes = [2, 32], strides = [1, 1]} : vector<2x128xf32> to vector<2x32xf32>
    %174 = math.tanh %173 : vector<2x32xf32>
    %175 = vector.extract_strided_slice %160 {offsets = [0, 96], sizes = [2, 32], strides = [1, 1]} : vector<2x128xf32> to vector<2x32xf32>
    %176 = arith.negf %175 : vector<2x32xf32>
    %177 = math.exp %176 : vector<2x32xf32>
    %cst_31 = arith.constant 1.000000e+00 : f32
    %178 = vector.broadcast %cst_31 : f32 to vector<2x32xf32>
    %179 = arith.addf %178, %177 : vector<2x32xf32>
    %180 = arith.divf %178, %179 : vector<2x32xf32>
    %181 = arith.mulf %172, %156 : vector<2x32xf32>
    %182 = arith.mulf %166, %174 : vector<2x32xf32>
    %183 = arith.addf %181, %182 : vector<2x32xf32>
    %184 = math.tanh %183 : vector<2x32xf32>
    %185 = arith.mulf %180, %184 : vector<2x32xf32>
    %cst_32 = arith.constant dense<0.000000e+00> : vector<2x128xf32>
    %186 = tpu.matmul %185, %75, %cst_32 {dimension_numbers = #tpu.dot_dimension_numbers<[1], [0], [0], [1], [0, 0, 1, 1], [], []>} : vector<2x32xf32>, vector<32x128xf32>, vector<2x128xf32> -> vector<2x128xf32>
    %187 = arith.addf %186, %71 : vector<2x128xf32>
    %188 = vector.extract_strided_slice %187 {offsets = [0, 0], sizes = [2, 32], strides = [1, 1]} : vector<2x128xf32> to vector<2x32xf32>
    %189 = arith.negf %188 : vector<2x32xf32>
    %190 = math.exp %189 : vector<2x32xf32>
    %cst_33 = arith.constant 1.000000e+00 : f32
    %191 = vector.broadcast %cst_33 : f32 to vector<2x32xf32>
    %192 = arith.addf %191, %190 : vector<2x32xf32>
    %193 = arith.divf %191, %192 : vector<2x32xf32>
    %194 = vector.extract_strided_slice %187 {offsets = [0, 32], sizes = [2, 32], strides = [1, 1]} : vector<2x128xf32> to vector<2x32xf32>
    %195 = arith.negf %194 : vector<2x32xf32>
    %196 = math.exp %195 : vector<2x32xf32>
    %cst_34 = arith.constant 1.000000e+00 : f32
    %197 = vector.broadcast %cst_34 : f32 to vector<2x32xf32>
    %198 = arith.addf %197, %196 : vector<2x32xf32>
    %199 = arith.divf %197, %198 : vector<2x32xf32>
    %200 = vector.extract_strided_slice %187 {offsets = [0, 64], sizes = [2, 32], strides = [1, 1]} : vector<2x128xf32> to vector<2x32xf32>
    %201 = math.tanh %200 : vector<2x32xf32>
    %202 = vector.extract_strided_slice %187 {offsets = [0, 96], sizes = [2, 32], strides = [1, 1]} : vector<2x128xf32> to vector<2x32xf32>
    %203 = arith.negf %202 : vector<2x32xf32>
    %204 = math.exp %203 : vector<2x32xf32>
    %cst_35 = arith.constant 1.000000e+00 : f32
    %205 = vector.broadcast %cst_35 : f32 to vector<2x32xf32>
    %206 = arith.addf %205, %204 : vector<2x32xf32>
    %207 = arith.divf %205, %206 : vector<2x32xf32>
    %208 = arith.mulf %199, %183 : vector<2x32xf32>
    %209 = arith.mulf %193, %201 : vector<2x32xf32>
    %210 = arith.addf %208, %209 : vector<2x32xf32>
    %211 = math.tanh %210 : vector<2x32xf32>
    %212 = arith.mulf %207, %211 : vector<2x32xf32>
    %cst_36 = arith.constant dense<0.000000e+00> : vector<2x128xf32>
    %213 = tpu.matmul %212, %75, %cst_36 {dimension_numbers = #tpu.dot_dimension_numbers<[1], [0], [0], [1], [0, 0, 1, 1], [], []>} : vector<2x32xf32>, vector<32x128xf32>, vector<2x128xf32> -> vector<2x128xf32>
    %214 = arith.addf %213, %74 : vector<2x128xf32>
    %215 = vector.extract_strided_slice %214 {offsets = [0, 0], sizes = [2, 32], strides = [1, 1]} : vector<2x128xf32> to vector<2x32xf32>
    %216 = arith.negf %215 : vector<2x32xf32>
    %217 = math.exp %216 : vector<2x32xf32>
    %cst_37 = arith.constant 1.000000e+00 : f32
    %218 = vector.broadcast %cst_37 : f32 to vector<2x32xf32>
    %219 = arith.addf %218, %217 : vector<2x32xf32>
    %220 = arith.divf %218, %219 : vector<2x32xf32>
    %221 = vector.extract_strided_slice %214 {offsets = [0, 32], sizes = [2, 32], strides = [1, 1]} : vector<2x128xf32> to vector<2x32xf32>
    %222 = arith.negf %221 : vector<2x32xf32>
    %223 = math.exp %222 : vector<2x32xf32>
    %cst_38 = arith.constant 1.000000e+00 : f32
    %224 = vector.broadcast %cst_38 : f32 to vector<2x32xf32>
    %225 = arith.addf %224, %223 : vector<2x32xf32>
    %226 = arith.divf %224, %225 : vector<2x32xf32>
    %227 = vector.extract_strided_slice %214 {offsets = [0, 64], sizes = [2, 32], strides = [1, 1]} : vector<2x128xf32> to vector<2x32xf32>
    %228 = math.tanh %227 : vector<2x32xf32>
    %229 = vector.extract_strided_slice %214 {offsets = [0, 96], sizes = [2, 32], strides = [1, 1]} : vector<2x128xf32> to vector<2x32xf32>
    %230 = arith.negf %229 : vector<2x32xf32>
    %231 = math.exp %230 : vector<2x32xf32>
    %cst_39 = arith.constant 1.000000e+00 : f32
    %232 = vector.broadcast %cst_39 : f32 to vector<2x32xf32>
    %233 = arith.addf %232, %231 : vector<2x32xf32>
    %234 = arith.divf %232, %233 : vector<2x32xf32>
    %235 = arith.mulf %226, %210 : vector<2x32xf32>
    %236 = arith.mulf %220, %228 : vector<2x32xf32>
    %237 = arith.addf %235, %236 : vector<2x32xf32>
    %238 = math.tanh %237 : vector<2x32xf32>
    %239 = arith.mulf %234, %238 : vector<2x32xf32>
    %240 = vector.extract_strided_slice %239 {offsets = [0, 16], sizes = [2, 16], strides = [1, 1]} : vector<2x32xf32> to vector<2x16xf32>
    %241 = vector.extract_strided_slice %239 {offsets = [0, 0], sizes = [2, 16], strides = [1, 1]} : vector<2x32xf32> to vector<2x16xf32>
    %242 = tpu.concatenate %240, %241 in 1 : vector<2x16xf32>, vector<2x16xf32> -> vector<2x32xf32>
    %c16 = arith.constant 16 : index
    %c0_40 = arith.constant 0 : index
    %243 = vector.load %arg2[%c16, %c0_40] : memref<32x128xf32, #tpu.memory_space<vmem>>, vector<2x8xf32>
    %244 = arith.mulf %243, %243 : vector<2x8xf32>
    %cst_41 = arith.constant dense<0.000000e+00> : vector<2xf32>
    %245 = vector.multi_reduction <add>, %244, %cst_41 [1] : vector<2x8xf32> to vector<2xf32>
    %246 = vector.shape_cast %245 : vector<2xf32> to vector<2x1xf32>
    %247 = math.sqrt %246 : vector<2x1xf32>
    %c24 = arith.constant 24 : index
    %c0_42 = arith.constant 0 : index
    %248 = vector.load %arg2[%c24, %c0_42] : memref<32x128xf32, #tpu.memory_space<vmem>>, vector<2x8xf32>
    %249 = arith.mulf %248, %248 : vector<2x8xf32>
    %cst_43 = arith.constant dense<0.000000e+00> : vector<2xf32>
    %250 = vector.multi_reduction <add>, %249, %cst_43 [1] : vector<2x8xf32> to vector<2xf32>
    %251 = vector.shape_cast %250 : vector<2xf32> to vector<2x1xf32>
    %252 = math.sqrt %251 : vector<2x1xf32>
    %253 = arith.mulf %243, %248 : vector<2x8xf32>
    %cst_44 = arith.constant dense<0.000000e+00> : vector<2xf32>
    %254 = vector.multi_reduction <add>, %253, %cst_44 [1] : vector<2x8xf32> to vector<2xf32>
    %255 = vector.shape_cast %254 : vector<2xf32> to vector<2x1xf32>
    %256 = arith.mulf %247, %252 : vector<2x1xf32>
    %cst_45 = arith.constant 9.99999997E-7 : f32
    %257 = vector.broadcast %cst_45 : f32 to vector<2x1xf32>
    %258 = arith.maximumf %256, %257 : vector<2x1xf32>
    %259 = arith.divf %255, %258 : vector<2x1xf32>
    %c24_46 = arith.constant 24 : index
    %c8_47 = arith.constant 8 : index
    %260 = vector.load %arg2[%c24_46, %c8_47] : memref<32x128xf32, #tpu.memory_space<vmem>>, vector<2x8xf32>
    %261 = arith.mulf %260, %260 : vector<2x8xf32>
    %cst_48 = arith.constant dense<0.000000e+00> : vector<2xf32>
    %262 = vector.multi_reduction <add>, %261, %cst_48 [1] : vector<2x8xf32> to vector<2xf32>
    %263 = vector.shape_cast %262 : vector<2xf32> to vector<2x1xf32>
    %264 = math.sqrt %263 : vector<2x1xf32>
    %265 = arith.mulf %243, %260 : vector<2x8xf32>
    %cst_49 = arith.constant dense<0.000000e+00> : vector<2xf32>
    %266 = vector.multi_reduction <add>, %265, %cst_49 [1] : vector<2x8xf32> to vector<2xf32>
    %267 = vector.shape_cast %266 : vector<2xf32> to vector<2x1xf32>
    %268 = arith.mulf %247, %264 : vector<2x1xf32>
    %cst_50 = arith.constant 9.99999997E-7 : f32
    %269 = vector.broadcast %cst_50 : f32 to vector<2x1xf32>
    %270 = arith.maximumf %268, %269 : vector<2x1xf32>
    %271 = arith.divf %267, %270 : vector<2x1xf32>
    %c24_51 = arith.constant 24 : index
    %c16_52 = arith.constant 16 : index
    %272 = vector.load %arg2[%c24_51, %c16_52] : memref<32x128xf32, #tpu.memory_space<vmem>>, vector<2x8xf32>
    %273 = arith.mulf %272, %272 : vector<2x8xf32>
    %cst_53 = arith.constant dense<0.000000e+00> : vector<2xf32>
    %274 = vector.multi_reduction <add>, %273, %cst_53 [1] : vector<2x8xf32> to vector<2xf32>
    %275 = vector.shape_cast %274 : vector<2xf32> to vector<2x1xf32>
    %276 = math.sqrt %275 : vector<2x1xf32>
    %277 = arith.mulf %243, %272 : vector<2x8xf32>
    %cst_54 = arith.constant dense<0.000000e+00> : vector<2xf32>
    %278 = vector.multi_reduction <add>, %277, %cst_54 [1] : vector<2x8xf32> to vector<2xf32>
    %279 = vector.shape_cast %278 : vector<2xf32> to vector<2x1xf32>
    %280 = arith.mulf %247, %276 : vector<2x1xf32>
    %cst_55 = arith.constant 9.99999997E-7 : f32
    %281 = vector.broadcast %cst_55 : f32 to vector<2x1xf32>
    %282 = arith.maximumf %280, %281 : vector<2x1xf32>
    %283 = arith.divf %279, %282 : vector<2x1xf32>
    %c24_56 = arith.constant 24 : index
    %c24_57 = arith.constant 24 : index
    %284 = vector.load %arg2[%c24_56, %c24_57] : memref<32x128xf32, #tpu.memory_space<vmem>>, vector<2x8xf32>
    %285 = arith.mulf %284, %284 : vector<2x8xf32>
    %cst_58 = arith.constant dense<0.000000e+00> : vector<2xf32>
    %286 = vector.multi_reduction <add>, %285, %cst_58 [1] : vector<2x8xf32> to vector<2xf32>
    %287 = vector.shape_cast %286 : vector<2xf32> to vector<2x1xf32>
    %288 = math.sqrt %287 : vector<2x1xf32>
    %289 = arith.mulf %243, %284 : vector<2x8xf32>
    %cst_59 = arith.constant dense<0.000000e+00> : vector<2xf32>
    %290 = vector.multi_reduction <add>, %289, %cst_59 [1] : vector<2x8xf32> to vector<2xf32>
    %291 = vector.shape_cast %290 : vector<2xf32> to vector<2x1xf32>
    %292 = arith.mulf %247, %288 : vector<2x1xf32>
    %cst_60 = arith.constant 9.99999997E-7 : f32
    %293 = vector.broadcast %cst_60 : f32 to vector<2x1xf32>
    %294 = arith.maximumf %292, %293 : vector<2x1xf32>
    %295 = arith.divf %291, %294 : vector<2x1xf32>
    %c24_61 = arith.constant 24 : index
    %c32 = arith.constant 32 : index
    %296 = vector.load %arg2[%c24_61, %c32] : memref<32x128xf32, #tpu.memory_space<vmem>>, vector<2x8xf32>
    %297 = arith.mulf %296, %296 : vector<2x8xf32>
    %cst_62 = arith.constant dense<0.000000e+00> : vector<2xf32>
    %298 = vector.multi_reduction <add>, %297, %cst_62 [1] : vector<2x8xf32> to vector<2xf32>
    %299 = vector.shape_cast %298 : vector<2xf32> to vector<2x1xf32>
    %300 = math.sqrt %299 : vector<2x1xf32>
    %301 = arith.mulf %243, %296 : vector<2x8xf32>
    %cst_63 = arith.constant dense<0.000000e+00> : vector<2xf32>
    %302 = vector.multi_reduction <add>, %301, %cst_63 [1] : vector<2x8xf32> to vector<2xf32>
    %303 = vector.shape_cast %302 : vector<2xf32> to vector<2x1xf32>
    %304 = arith.mulf %247, %300 : vector<2x1xf32>
    %cst_64 = arith.constant 9.99999997E-7 : f32
    %305 = vector.broadcast %cst_64 : f32 to vector<2x1xf32>
    %306 = arith.maximumf %304, %305 : vector<2x1xf32>
    %307 = arith.divf %303, %306 : vector<2x1xf32>
    %308 = tpu.concatenate %259, %271, %283, %295, %307 in 1 : vector<2x1xf32>, vector<2x1xf32>, vector<2x1xf32>, vector<2x1xf32>, vector<2x1xf32> -> vector<2x5xf32>
    %cst_65 = arith.constant dense<0xFF800000> : vector<2xf32>
    %309 = vector.multi_reduction <maximumf>, %308, %cst_65 [1] : vector<2x5xf32> to vector<2xf32>
    %310 = vector.shape_cast %309 : vector<2xf32> to vector<2x1xf32>
    %311 = vector.broadcast %310 : vector<2x1xf32> to vector<2x5xf32>
    %312 = arith.subf %308, %311 : vector<2x5xf32>
    %313 = math.exp %312 : vector<2x5xf32>
    %cst_66 = arith.constant dense<0.000000e+00> : vector<2xf32>
    %314 = vector.multi_reduction <add>, %313, %cst_66 [1] : vector<2x5xf32> to vector<2xf32>
    %315 = vector.shape_cast %314 : vector<2xf32> to vector<2x1xf32>
    %316 = vector.broadcast %315 : vector<2x1xf32> to vector<2x5xf32>
    %317 = arith.divf %313, %316 : vector<2x5xf32>
    %318 = vector.extract_strided_slice %317 {offsets = [0, 0], sizes = [2, 1], strides = [1, 1]} : vector<2x5xf32> to vector<2x1xf32>
    %319 = vector.broadcast %318 : vector<2x1xf32> to vector<2x8xf32>
    %320 = arith.mulf %319, %248 : vector<2x8xf32>
    %321 = vector.extract_strided_slice %317 {offsets = [0, 1], sizes = [2, 1], strides = [1, 1]} : vector<2x5xf32> to vector<2x1xf32>
    %322 = vector.broadcast %321 : vector<2x1xf32> to vector<2x8xf32>
    %323 = arith.mulf %322, %260 : vector<2x8xf32>
    %324 = arith.addf %320, %323 : vector<2x8xf32>
    %325 = vector.extract_strided_slice %317 {offsets = [0, 2], sizes = [2, 1], strides = [1, 1]} : vector<2x5xf32> to vector<2x1xf32>
    %326 = vector.broadcast %325 : vector<2x1xf32> to vector<2x8xf32>
    %327 = arith.mulf %326, %272 : vector<2x8xf32>
    %328 = arith.addf %324, %327 : vector<2x8xf32>
    %329 = vector.extract_strided_slice %317 {offsets = [0, 3], sizes = [2, 1], strides = [1, 1]} : vector<2x5xf32> to vector<2x1xf32>
    %330 = vector.broadcast %329 : vector<2x1xf32> to vector<2x8xf32>
    %331 = arith.mulf %330, %284 : vector<2x8xf32>
    %332 = arith.addf %328, %331 : vector<2x8xf32>
    %333 = vector.extract_strided_slice %317 {offsets = [0, 4], sizes = [2, 1], strides = [1, 1]} : vector<2x5xf32> to vector<2x1xf32>
    %334 = vector.broadcast %333 : vector<2x1xf32> to vector<2x8xf32>
    %335 = arith.mulf %334, %296 : vector<2x8xf32>
    %336 = arith.addf %332, %335 : vector<2x8xf32>
    %cst_67 = arith.constant 1.000000e+00 : f32
    %337 = vector.broadcast %cst_67 : f32 to vector<2x1xf32>
    %338 = tpu.concatenate %242, %336, %337 in 1 : vector<2x32xf32>, vector<2x8xf32>, vector<2x1xf32> -> vector<2x41xf32>
    %c616 = arith.constant 616 : index
    %c0_68 = arith.constant 0 : index
    %339 = vector.load %arg1[%c616, %c0_68] : memref<624x128xf32, #tpu.memory_space<vmem>>, vector<1x41xf32>
    %340 = vector.broadcast %339 : vector<1x41xf32> to vector<2x41xf32>
    %341 = arith.mulf %338, %340 : vector<2x41xf32>
    %cst_69 = arith.constant dense<0.000000e+00> : vector<2xf32>
    %342 = vector.multi_reduction <add>, %341, %cst_69 [1] : vector<2x41xf32> to vector<2xf32>
    %343 = vector.shape_cast %342 : vector<2xf32> to vector<2x1xf32>
    %344 = arith.negf %343 : vector<2x1xf32>
    %345 = math.exp %344 : vector<2x1xf32>
    %cst_70 = arith.constant 1.000000e+00 : f32
    %346 = vector.broadcast %cst_70 : f32 to vector<2x1xf32>
    %347 = arith.addf %346, %345 : vector<2x1xf32>
    %348 = arith.divf %346, %347 : vector<2x1xf32>
    %c0_71 = arith.constant 0 : index
    %c0_72 = arith.constant 0 : index
    %349 = vector.load %arg3[%c0_71, %c0_72] : memref<2x1xf32, #tpu.memory_space<vmem>>, vector<2x1xf32>
    tpu.vector_store %arg3[%c0_71, %c0_72], %348 {strides = array<i32>} : memref<2x1xf32, #tpu.memory_space<vmem>>, vector<2x1xf32>,
    return
  }
}

</mosaic_0001>

<llo_original>
// kernel: lstm_tdm_forward.1
$region0: #{lstm_tdm_forward.1}
  #allocation0 [shape = 'u32[]', space=smem, size = 0x4, offset = 0x4, fixed_abs, tag = 'smem constant byte address 0x4 - core index']
  #allocation1 [shape = 'u32[72,128]{1,0:T(1,128)}', space=vmem, size = 0x9000, scoped, tag = 'internal scratch']
  %s0 = inlined_call_operand.vmem [shape: s32[200,1], index: 0, kind: input, shape index: {}]
  %s1 = inlined_call_operand.hbm [shape: f32[624,128], index: 1, kind: input, shape index: {}]
  %s2 = inlined_call_operand.vmem [shape: f32[32,128], index: 2, kind: input, shape index: {}]
  %s3 = inlined_call_operand.vmem [shape: f32[2,1], index: 3, kind: output, shape index: {}]
  %s4 = sld [smem:[#allocation0]]
  $region26: #{lstm_tdm_forward.1} parent=0
    _
  %s6 = ssub.s32 1, %s4
  %s7 = scalar_select 0, %s6, %s4
  $region1: #{lstm_tdm_forward.1} parent=0
    #allocation2 [shape = 'u8[319488]{0}', space=vmem, size = 0x4e000, scoped, tag = 'input window, operand 1, single buffered']
    #allocation3 [shape = 's32[1]{0}', space=sflag, size = 0x4, scoped, tag = 'scoped memory for lstm_tdm_forward.1']
    %8 = vsyncpa [#allocation3], 0
    // Predicated region
    $region2: #{lstm_tdm_forward.1} parent=1 // pred_check
      _
    $region3: #{lstm_tdm_forward.1} parent=1 // pred_check_branch
      %10 = sbr.rel (0) target = $region5
    $region4: #{lstm_tdm_forward.1} parent=1 // pred_region
      _
    $region5: #{lstm_tdm_forward.1} parent=1 // pred_fallthru
      _
    // Predicated region
    $region6: #{lstm_tdm_forward.1} parent=1 // pred_check
      _
    $region7: #{lstm_tdm_forward.1} parent=1 // pred_check_branch
      %12 = sbr.rel (0) target = $region9
    $region8: #{lstm_tdm_forward.1} parent=1 // pred_region
      %14 = vsyncadd [#allocation3], 0
      %s15 = sshll.u32 %s1, 4
      %s16 = int_to_ptr.hbm [resolvable:$true] %s15
      %s17 = sshll.u32 [#allocation2], 4
      %s18 = int_to_ptr.vmem [resolvable:$true] %s17
      %23 = dma.hbm_to_vmem [thread:$0]  %s16, 9984, %s18, [#allocation3], 128, 128, 8
    $region9: #{lstm_tdm_forward.1} parent=1 // pred_fallthru
      _
    // Predicated region
    $region10: #{lstm_tdm_forward.1} parent=1 // pred_check
      _
    $region11: #{lstm_tdm_forward.1} parent=1 // pred_check_branch
      %25 = sbr.rel (0) target = $region13
    $region12: #{lstm_tdm_forward.1} parent=1 // pred_region
      _
    $region13: #{lstm_tdm_forward.1} parent=1 // pred_fallthru
      _
    // Predicated region
    $region14: #{lstm_tdm_forward.1} parent=1 // pred_check
      _
    $region15: #{lstm_tdm_forward.1} parent=1 // pred_check_branch
      %27 = sbr.rel (0) target = $region17
    $region16: #{lstm_tdm_forward.1} parent=1 // pred_region
      %29 = dma.done [#allocation3], 9984
    $region17: #{lstm_tdm_forward.1} parent=1 // pred_fallthru
      _
    %v30 = vld [vmem:[%s0] sm:$0xff]
    %v31 = vld [vmem:[%s0 + $0x8] sm:$0xff]
    %v32 = vld [vmem:[%s0 + $0x10] sm:$0xff]
    %v33 = vld [vmem:[%s0 + $0x18] sm:$0xff]
    %v34 = vld [vmem:[%s0 + $0x20] sm:$0xff]
    %v35 = vld [vmem:[%s0 + $0x28] sm:$0xff]
    %v36 = vld [vmem:[%s0 + $0x30] sm:$0xff]
    %v37 = vld [vmem:[%s0 + $0x38] sm:$0xff]
    %v38 = vld [vmem:[%s0 + $0x40] sm:$0xff]
    %v39 = vld [vmem:[%s0 + $0x48] sm:$0xff]
    %v40 = vld [vmem:[%s0 + $0x50] sm:$0xff]
    %v41 = vld [vmem:[%s0 + $0x58] sm:$0xff]
    %v42 = vld [vmem:[%s0 + $0x60] sm:$0xff]
    %v43 = vld [vmem:[%s0 + $0x68] sm:$0xff]
    %v44 = vld [vmem:[%s0 + $0x70] sm:$0xff]
    %v45 = vld [vmem:[%s0 + $0x78] sm:$0xff]
    %v46 = vld [vmem:[%s0 + $0x80] sm:$0xff]
    %v47 = vld [vmem:[%s0 + $0x88] sm:$0xff]
    %v48 = vld [vmem:[%s0 + $0x90] sm:$0xff]
    %v49 = vld [vmem:[%s0 + $0x98] sm:$0xff]
    %v50 = vld [vmem:[%s0 + $0xa0] sm:$0xff]
    %v51 = vld [vmem:[%s0 + $0xa8] sm:$0xff]
    %v52 = vld [vmem:[%s0 + $0xb0] sm:$0xff]
    %v53 = vld [vmem:[%s0 + $0xb8] sm:$0xff]
    %v54 = vld [vmem:[%s0 + $0xc0] sm:$0xff]
    %v55 = vlaneseq
    %v56 = vand.u32 %v55, 127
    %57 = vset.pattern.permute.xlu0 0
    %58 = vperm.xlu0 %57, %v30
    %v59 = vpop.permute.xlu0 %58
    %60 = vset.pattern.permute.xlu0 0
    %61 = vperm.xlu0 %60, %v31
    %v62 = vpop.permute.xlu0 %61
    %63 = vset.pattern.permute.xlu0 0
    %64 = vperm.xlu0 %63, %v32
    %v65 = vpop.permute.xlu0 %64
    %66 = vset.pattern.permute.xlu0 0
    %67 = vperm.xlu0 %66, %v33
    %v68 = vpop.permute.xlu0 %67
    %69 = vset.pattern.permute.xlu0 0
    %70 = vperm.xlu0 %69, %v34
    %v71 = vpop.permute.xlu0 %70
    %72 = vset.pattern.permute.xlu0 0
    %73 = vperm.xlu0 %72, %v35
    %v74 = vpop.permute.xlu0 %73
    %75 = vset.pattern.permute.xlu0 0
    %76 = vperm.xlu0 %75, %v36
    %v77 = vpop.permute.xlu0 %76
    %78 = vset.pattern.permute.xlu0 0
    %79 = vperm.xlu0 %78, %v37
    %v80 = vpop.permute.xlu0 %79
    %81 = vset.pattern.permute.xlu0 0
    %82 = vperm.xlu0 %81, %v38
    %v83 = vpop.permute.xlu0 %82
    %84 = vset.pattern.permute.xlu0 0
    %85 = vperm.xlu0 %84, %v39
    %v86 = vpop.permute.xlu0 %85
    %87 = vset.pattern.permute.xlu0 0
    %88 = vperm.xlu0 %87, %v40
    %v89 = vpop.permute.xlu0 %88
    %90 = vset.pattern.permute.xlu0 0
    %91 = vperm.xlu0 %90, %v41
    %v92 = vpop.permute.xlu0 %91
    %93 = vset.pattern.permute.xlu0 0
    %94 = vperm.xlu0 %93, %v42
    %v95 = vpop.permute.xlu0 %94
    %96 = vset.pattern.permute.xlu0 0
    %97 = vperm.xlu0 %96, %v43
    %v98 = vpop.permute.xlu0 %97
    %99 = vset.pattern.permute.xlu0 0
    %100 = vperm.xlu0 %99, %v44
    %v101 = vpop.permute.xlu0 %100
    %102 = vset.pattern.permute.xlu0 0
    %103 = vperm.xlu0 %102, %v45
    %v104 = vpop.permute.xlu0 %103
    %105 = vset.pattern.permute.xlu0 0
    %106 = vperm.xlu0 %105, %v46
    %v107 = vpop.permute.xlu0 %106
    %108 = vset.pattern.permute.xlu0 0
    %109 = vperm.xlu0 %108, %v47
    %v110 = vpop.permute.xlu0 %109
    %111 = vset.pattern.permute.xlu0 0
    %112 = vperm.xlu0 %111, %v48
    %v113 = vpop.permute.xlu0 %112
    %114 = vset.pattern.permute.xlu0 0
    %115 = vperm.xlu0 %114, %v49
    %v116 = vpop.permute.xlu0 %115
    %117 = vset.pattern.permute.xlu0 0
    %118 = vperm.xlu0 %117, %v50
    %v119 = vpop.permute.xlu0 %118
    %120 = vset.pattern.permute.xlu0 0
    %121 = vperm.xlu0 %120, %v51
    %v122 = vpop.permute.xlu0 %121
    %123 = vset.pattern.permute.xlu0 0
    %124 = vperm.xlu0 %123, %v52
    %v125 = vpop.permute.xlu0 %124
    %126 = vset.pattern.permute.xlu0 0
    %127 = vperm.xlu0 %126, %v53
    %v128 = vpop.permute.xlu0 %127
    %vm129 = vcmp.eq.s32.totalorder %v59, %v56
    %vm130 = vcmp.eq.s32.totalorder %v62, %v56
    %vm131 = vcmp.eq.s32.totalorder %v65, %v56
    %vm132 = vcmp.eq.s32.totalorder %v68, %v56
    %vm133 = vcmp.eq.s32.totalorder %v71, %v56
    %vm134 = vcmp.eq.s32.totalorder %v74, %v56
    %vm135 = vcmp.eq.s32.totalorder %v77, %v56
    %vm136 = vcmp.eq.s32.totalorder %v80, %v56
    %vm137 = vcmp.eq.s32.totalorder %v83, %v56
    %vm138 = vcmp.eq.s32.totalorder %v86, %v56
    %vm139 = vcmp.eq.s32.totalorder %v89, %v56
    %vm140 = vcmp.eq.s32.totalorder %v92, %v56
    %vm141 = vcmp.eq.s32.totalorder %v95, %v56
    %vm142 = vcmp.eq.s32.totalorder %v98, %v56
    %vm143 = vcmp.eq.s32.totalorder %v101, %v56
    %vm144 = vcmp.eq.s32.totalorder %v104, %v56
    %vm145 = vcmp.eq.s32.totalorder %v107, %v56
    %vm146 = vcmp.eq.s32.totalorder %v110, %v56
    %vm147 = vcmp.eq.s32.totalorder %v113, %v56
    %vm148 = vcmp.eq.s32.totalorder %v116, %v56
    %vm149 = vcmp.eq.s32.totalorder %v119, %v56
    %vm150 = vcmp.eq.s32.totalorder %v122, %v56
    %vm151 = vcmp.eq.s32.totalorder %v125, %v56
    %vm152 = vcmp.eq.s32.totalorder %v128, %v56
    %v153 = vsel %vm129, 1, 0
    %v154 = vsel %vm130, 1, 0
    %v155 = vsel %vm131, 1, 0
    %v156 = vsel %vm132, 1, 0
    %v157 = vsel %vm133, 1, 0
    %v158 = vsel %vm134, 1, 0
    %v159 = vsel %vm135, 1, 0
    %v160 = vsel %vm136, 1, 0
    %v161 = vsel %vm137, 1, 0
    %v162 = vsel %vm138, 1, 0
    %v163 = vsel %vm139, 1, 0
    %v164 = vsel %vm140, 1, 0
    %v165 = vsel %vm141, 1, 0
    %v166 = vsel %vm142, 1, 0
    %v167 = vsel %vm143, 1, 0
    %v168 = vsel %vm144, 1, 0
    %v169 = vsel %vm145, 1, 0
    %v170 = vsel %vm146, 1, 0
    %v171 = vsel %vm147, 1, 0
    %v172 = vsel %vm148, 1, 0
    %v173 = vsel %vm149, 1, 0
    %v174 = vsel %vm150, 1, 0
    %v175 = vsel %vm151, 1, 0
    %v176 = vsel %vm152, 1, 0
    %v177 = vcvt.s32.f32 %v153
    %v178 = vcvt.s32.f32 %v154
    %v179 = vcvt.s32.f32 %v155
    %v180 = vcvt.s32.f32 %v156
    %v181 = vcvt.s32.f32 %v157
    %v182 = vcvt.s32.f32 %v158
    %v183 = vcvt.s32.f32 %v159
    %v184 = vcvt.s32.f32 %v160
    %v185 = vcvt.s32.f32 %v161
    %v186 = vcvt.s32.f32 %v162
    %v187 = vcvt.s32.f32 %v163
    %v188 = vcvt.s32.f32 %v164
    %v189 = vcvt.s32.f32 %v165
    %v190 = vcvt.s32.f32 %v166
    %v191 = vcvt.s32.f32 %v167
    %v192 = vcvt.s32.f32 %v168
    %v193 = vcvt.s32.f32 %v169
    %v194 = vcvt.s32.f32 %v170
    %v195 = vcvt.s32.f32 %v171
    %v196 = vcvt.s32.f32 %v172
    %v197 = vcvt.s32.f32 %v173
    %v198 = vcvt.s32.f32 %v174
    %v199 = vcvt.s32.f32 %v175
    %v200 = vcvt.s32.f32 %v176
    %201 = vset.pattern.permute.xlu0 0
    %202 = vperm.xlu0 %201, %v54
    %v203 = vpop.permute.xlu0 %202
    %vm204 = vcmp.eq.s32.totalorder %v203, %v56
    %v205 = vsel %vm204, 1, 0
    %v206 = vcvt.s32.f32 %v205
    %vm232 = vcmask 1046528
    %v233 = vrot.slane %v177, 1
    %v234 = vrot.slane %v178, 1
    %v235 = vsel %vm232, %v233, %v234
    %v236 = vrot.slane %v179, 1
    %v237 = vsel %vm232, %v234, %v236
    %v238 = vrot.slane %v180, 1
    %v239 = vsel %vm232, %v236, %v238
    %v240 = vrot.slane %v181, 1
    %v241 = vsel %vm232, %v238, %v240
    %v242 = vrot.slane %v182, 1
    %v243 = vsel %vm232, %v240, %v242
    %v244 = vrot.slane %v183, 1
    %v245 = vsel %vm232, %v242, %v244
    %v246 = vrot.slane %v184, 1
    %v247 = vsel %vm232, %v244, %v246
    %v248 = vrot.slane %v185, 1
    %v249 = vsel %vm232, %v246, %v248
    %v250 = vrot.slane %v186, 1
    %v251 = vsel %vm232, %v248, %v250
    %v252 = vrot.slane %v187, 1
    %v253 = vsel %vm232, %v250, %v252
    %v254 = vrot.slane %v188, 1
    %v255 = vsel %vm232, %v252, %v254
    %v256 = vrot.slane %v189, 1
    %v257 = vsel %vm232, %v254, %v256
    %v258 = vrot.slane %v190, 1
    %v259 = vsel %vm232, %v256, %v258
    %v260 = vrot.slane %v191, 1
    %v261 = vsel %vm232, %v258, %v260
    %v262 = vrot.slane %v192, 1
    %v263 = vsel %vm232, %v260, %v262
    %v264 = vrot.slane %v193, 1
    %v265 = vsel %vm232, %v262, %v264
    %v266 = vrot.slane %v194, 1
    %v267 = vsel %vm232, %v264, %v266
    %v268 = vrot.slane %v195, 1
    %v269 = vsel %vm232, %v266, %v268
    %v270 = vrot.slane %v196, 1
    %v271 = vsel %vm232, %v268, %v270
    %v272 = vrot.slane %v197, 1
    %v273 = vsel %vm232, %v270, %v272
    %v274 = vrot.slane %v198, 1
    %v275 = vsel %vm232, %v272, %v274
    %v276 = vrot.slane %v199, 1
    %v277 = vsel %vm232, %v274, %v276
    %v278 = vrot.slane %v200, 1
    %v279 = vsel %vm232, %v276, %v278
    %v280 = vrot.slane %v206, 1
    %v281 = vsel %vm232, %v278, %v280
    %vm306 = vcmask 1045504
    %v307 = vrot.slane %v177, 2
    %v308 = vrot.slane %v178, 2
    %v309 = vsel %vm306, %v307, %v308
    %v310 = vrot.slane %v179, 2
    %v311 = vsel %vm306, %v308, %v310
    %v312 = vrot.slane %v180, 2
    %v313 = vsel %vm306, %v310, %v312
    %v314 = vrot.slane %v181, 2
    %v315 = vsel %vm306, %v312, %v314
    %v316 = vrot.slane %v182, 2
    %v317 = vsel %vm306, %v314, %v316
    %v318 = vrot.slane %v183, 2
    %v319 = vsel %vm306, %v316, %v318
    %v320 = vrot.slane %v184, 2
    %v321 = vsel %vm306, %v318, %v320
    %v322 = vrot.slane %v185, 2
    %v323 = vsel %vm306, %v320, %v322
    %v324 = vrot.slane %v186, 2
    %v325 = vsel %vm306, %v322, %v324
    %v326 = vrot.slane %v187, 2
    %v327 = vsel %vm306, %v324, %v326
    %v328 = vrot.slane %v188, 2
    %v329 = vsel %vm306, %v326, %v328
    %v330 = vrot.slane %v189, 2
    %v331 = vsel %vm306, %v328, %v330
    %v332 = vrot.slane %v190, 2
    %v333 = vsel %vm306, %v330, %v332
    %v334 = vrot.slane %v191, 2
    %v335 = vsel %vm306, %v332, %v334
    %v336 = vrot.slane %v192, 2
    %v337 = vsel %vm306, %v334, %v336
    %v338 = vrot.slane %v193, 2
    %v339 = vsel %vm306, %v336, %v338
    %v340 = vrot.slane %v194, 2
    %v341 = vsel %vm306, %v338, %v340
    %v342 = vrot.slane %v195, 2
    %v343 = vsel %vm306, %v340, %v342
    %v344 = vrot.slane %v196, 2
    %v345 = vsel %vm306, %v342, %v344
    %v346 = vrot.slane %v197, 2
    %v347 = vsel %vm306, %v344, %v346
    %v348 = vrot.slane %v198, 2
    %v349 = vsel %vm306, %v346, %v348
    %v350 = vrot.slane %v199, 2
    %v351 = vsel %vm306, %v348, %v350
    %v352 = vrot.slane %v200, 2
    %v353 = vsel %vm306, %v350, %v352
    %v354 = vrot.slane %v206, 2
    %v355 = vsel %vm306, %v352, %v354
    %vm380 = vcmask 1044480
    %v381 = vrot.slane %v177, 3
    %v382 = vrot.slane %v178, 3
    %v383 = vsel %vm380, %v381, %v382
    %v384 = vrot.slane %v179, 3
    %v385 = vsel %vm380, %v382, %v384
    %v386 = vrot.slane %v180, 3
    %v387 = vsel %vm380, %v384, %v386
    %v388 = vrot.slane %v181, 3
    %v389 = vsel %vm380, %v386, %v388
    %v390 = vrot.slane %v182, 3
    %v391 = vsel %vm380, %v388, %v390
    %v392 = vrot.slane %v183, 3
    %v393 = vsel %vm380, %v390, %v392
    %v394 = vrot.slane %v184, 3
    %v395 = vsel %vm380, %v392, %v394
    %v396 = vrot.slane %v185, 3
    %v397 = vsel %vm380, %v394, %v396
    %v398 = vrot.slane %v186, 3
    %v399 = vsel %vm380, %v396, %v398
    %v400 = vrot.slane %v187, 3
    %v401 = vsel %vm380, %v398, %v400
    %v402 = vrot.slane %v188, 3
    %v403 = vsel %vm380, %v400, %v402
    %v404 = vrot.slane %v189, 3
    %v405 = vsel %vm380, %v402, %v404
    %v406 = vrot.slane %v190, 3
    %v407 = vsel %vm380, %v404, %v406
    %v408 = vrot.slane %v191, 3
    %v409 = vsel %vm380, %v406, %v408
    %v410 = vrot.slane %v192, 3
    %v411 = vsel %vm380, %v408, %v410
    %v412 = vrot.slane %v193, 3
    %v413 = vsel %vm380, %v410, %v412
    %v414 = vrot.slane %v194, 3
    %v415 = vsel %vm380, %v412, %v414
    %v416 = vrot.slane %v195, 3
    %v417 = vsel %vm380, %v414, %v416
    %v418 = vrot.slane %v196, 3
    %v419 = vsel %vm380, %v416, %v418
    %v420 = vrot.slane %v197, 3
    %v421 = vsel %vm380, %v418, %v420
    %v422 = vrot.slane %v198, 3
    %v423 = vsel %vm380, %v420, %v422
    %v424 = vrot.slane %v199, 3
    %v425 = vsel %vm380, %v422, %v424
    %v426 = vrot.slane %v200, 3
    %v427 = vsel %vm380, %v424, %v426
    %v428 = vrot.slane %v206, 3
    %v429 = vsel %vm380, %v426, %v428
    %v454 = vld [vmem:[#allocation2] sm:$0xff]
    %v455 = vld [vmem:[#allocation2 + $0x8] sm:$0xff]
    %v456 = vld [vmem:[#allocation2 + $0x10] sm:$0xff]
    %v457 = vld [vmem:[#allocation2 + $0x18] sm:$0xff]
    %v458 = vld [vmem:[#allocation2 + $0x20] sm:$0xff]
    %v459 = vld [vmem:[#allocation2 + $0x28] sm:$0xff]
    %v460 = vld [vmem:[#allocation2 + $0x30] sm:$0xff]
    %v461 = vld [vmem:[#allocation2 + $0x38] sm:$0xff]
    %v462 = vld [vmem:[#allocation2 + $0x40] sm:$0xff]
    %v463 = vld [vmem:[#allocation2 + $0x48] sm:$0xff]
    %v464 = vld [vmem:[#allocation2 + $0x50] sm:$0xff]
    %v465 = vld [vmem:[#allocation2 + $0x58] sm:$0xff]
    %v466 = vld [vmem:[#allocation2 + $0x60] sm:$0xff]
    %v467 = vld [vmem:[#allocation2 + $0x68] sm:$0xff]
    %v468 = vld [vmem:[#allocation2 + $0x70] sm:$0xff]
    %v469 = vld [vmem:[#allocation2 + $0x78] sm:$0xff]
    %v470 = vld [vmem:[#allocation2 + $0x80] sm:$0xff]
    %v471 = vld [vmem:[#allocation2 + $0x88] sm:$0xff]
    %v472 = vld [vmem:[#allocation2 + $0x90] sm:$0xff]
    %v473 = vld [vmem:[#allocation2 + $0x98] sm:$0xff]
    %v474 = vld [vmem:[#allocation2 + $0xa0] sm:$0xff]
    %v475 = vld [vmem:[#allocation2 + $0xa8] sm:$0xff]
    %v476 = vld [vmem:[#allocation2 + $0xb0] sm:$0xff]
    %v477 = vld [vmem:[#allocation2 + $0xb8] sm:$0xff]
    %v478 = vld [vmem:[#allocation2 + $0xc0] sm:$0xff]
    %v479 = vld [vmem:[#allocation2 + $0xc8] sm:$0xff]
    %v480 = vld [vmem:[#allocation2 + $0xd0] sm:$0xff]
    %v481 = vld [vmem:[#allocation2 + $0xd8] sm:$0xff]
    %v482 = vld [vmem:[#allocation2 + $0xe0] sm:$0xff]
    %v483 = vld [vmem:[#allocation2 + $0xe8] sm:$0xff]
    %v484 = vld [vmem:[#allocation2 + $0xf0] sm:$0xff]
    %v485 = vld [vmem:[#allocation2 + $0xf8] sm:$0xff]
    %v486 = vld [vmem:[#allocation2 + $0x100] sm:$0xff]
    %v487 = vld [vmem:[#allocation2 + $0x108] sm:$0xff]
    %v488 = vld [vmem:[#allocation2 + $0x110] sm:$0xff]
    %v489 = vld [vmem:[#allocation2 + $0x118] sm:$0xff]
    %v490 = vld [vmem:[#allocation2 + $0x120] sm:$0xff]
    %v491 = vld [vmem:[#allocation2 + $0x128] sm:$0xff]
    %v492 = vld [vmem:[#allocation2 + $0x130] sm:$0xff]
    %v493 = vld [vmem:[#allocation2 + $0x138] sm:$0xff]
    %v494 = vld [vmem:[#allocation2 + $0x140] sm:$0xff]
    %v495 = vld [vmem:[#allocation2 + $0x148] sm:$0xff]
    %v496 = vld [vmem:[#allocation2 + $0x150] sm:$0xff]
    %v497 = vld [vmem:[#allocation2 + $0x158] sm:$0xff]
    %v498 = vld [vmem:[#allocation2 + $0x160] sm:$0xff]
    %v499 = vld [vmem:[#allocation2 + $0x168] sm:$0xff]
    %v500 = vld [vmem:[#allocation2 + $0x170] sm:$0xff]
    %v501 = vld [vmem:[#allocation2 + $0x178] sm:$0xff]
    %v502 = vld [vmem:[#allocation2 + $0x180] sm:$0xff]
    %v503 = vld [vmem:[#allocation2 + $0x188] sm:$0xff]
    %v504 = vld [vmem:[#allocation2 + $0x190] sm:$0xff]
    %v505 = vld [vmem:[#allocation2 + $0x198] sm:$0xff]
    %v506 = vld [vmem:[#allocation2 + $0x1a0] sm:$0xff]
    %v507 = vld [vmem:[#allocation2 + $0x1a8] sm:$0xff]
    %v508 = vld [vmem:[#allocation2 + $0x1b0] sm:$0xff]
    %v509 = vld [vmem:[#allocation2 + $0x1b8] sm:$0xff]
    %v510 = vld [vmem:[#allocation2 + $0x1c0] sm:$0xff]
    %v511 = vld [vmem:[#allocation2 + $0x1c8] sm:$0xff]
    %v512 = vld [vmem:[#allocation2 + $0x1d0] sm:$0xff]
    %v513 = vld [vmem:[#allocation2 + $0x1d8] sm:$0xff]
    %v514 = vld [vmem:[#allocation2 + $0x1e0] sm:$0xff]
    %v515 = vld [vmem:[#allocation2 + $0x1e8] sm:$0xff]
    %v516 = vld [vmem:[#allocation2 + $0x1f0] sm:$0xff]
    %v517 = vld [vmem:[#allocation2 + $0x1f8] sm:$0xff]
    %v518 = vld [vmem:[#allocation2 + $0x200] sm:$0x1]
    %v519 = vperm.slane %v518, 0
    %520 = vmatpush.msra.mxu0 %v469
    %521 = vmatpush.msra.mxu0 %v468
    %522 = vmatpush.msra.mxu0 %v467
    %523 = vmatpush.msra.mxu0 %v466
    %524 = vmatpush.msra.mxu0 %v465
    %525 = vmatpush.msra.mxu0 %v464
    %526 = vmatpush.msra.mxu0 %v463
    %527 = vmatpush.msra.mxu0 %v462
    %528 = vmatpush.msra.mxu0 %v461
    %529 = vmatpush.msra.mxu0 %v460
    %530 = vmatpush.msra.mxu0 %v459
    %531 = vmatpush.msra.mxu0 %v458
    %532 = vmatpush.msra.mxu0 %v457
    %533 = vmatpush.msra.mxu0 %v456
    %534 = vmatpush.msra.mxu0 %v455
    %535 = vmatpush.msra.mxu0 %v454
    %536 = vmatmul.f32.gmra.mxu0 %v177
    %v537 = vpop.f32.mrf.mxu0
    %v538 = vadd.f32 %v519, %v537
    %539 = vmatmul.f32.gmra.mxu0 %v178
    %v540 = vpop.f32.mrf.mxu0
    %v541 = vadd.f32 %v519, %v540
    %542 = vmatmul.f32.gmra.mxu0 %v179
    %v543 = vpop.f32.mrf.mxu0
    %v544 = vadd.f32 %v519, %v543
    %545 = vmatmul.f32.gmra.mxu0 %v180
    %v546 = vpop.f32.mrf.mxu0
    %v547 = vadd.f32 %v519, %v546
    %548 = vmatmul.f32.gmra.mxu0 %v181
    %v549 = vpop.f32.mrf.mxu0
    %v550 = vadd.f32 %v519, %v549
    %551 = vmatmul.f32.gmra.mxu0 %v182
    %v552 = vpop.f32.mrf.mxu0
    %v553 = vadd.f32 %v519, %v552
    %554 = vmatmul.f32.gmra.mxu0 %v183
    %v555 = vpop.f32.mrf.mxu0
    %v556 = vadd.f32 %v519, %v555
    %557 = vmatmul.f32.gmra.mxu0 %v184
    %v558 = vpop.f32.mrf.mxu0
    %v559 = vadd.f32 %v519, %v558
    %560 = vmatmul.f32.gmra.mxu0 %v185
    %v561 = vpop.f32.mrf.mxu0
    %v562 = vadd.f32 %v519, %v561
    %563 = vmatmul.f32.gmra.mxu0 %v186
    %v564 = vpop.f32.mrf.mxu0
    %v565 = vadd.f32 %v519, %v564
    %566 = vmatmul.f32.gmra.mxu0 %v187
    %v567 = vpop.f32.mrf.mxu0
    %v568 = vadd.f32 %v519, %v567
    %569 = vmatmul.f32.gmra.mxu0 %v188
    %v570 = vpop.f32.mrf.mxu0
    %v571 = vadd.f32 %v519, %v570
    %572 = vmatmul.f32.gmra.mxu0 %v189
    %v573 = vpop.f32.mrf.mxu0
    %v574 = vadd.f32 %v519, %v573
    %575 = vmatmul.f32.gmra.mxu0 %v190
    %v576 = vpop.f32.mrf.mxu0
    %v577 = vadd.f32 %v519, %v576
    %578 = vmatmul.f32.gmra.mxu0 %v191
    %v579 = vpop.f32.mrf.mxu0
    %v580 = vadd.f32 %v519, %v579
    %581 = vmatmul.f32.gmra.mxu0 %v192
    %v582 = vpop.f32.mrf.mxu0
    %v583 = vadd.f32 %v519, %v582
    %584 = vmatmul.f32.gmra.mxu0 %v193
    %v585 = vpop.f32.mrf.mxu0
    %v586 = vadd.f32 %v519, %v585
    %587 = vmatmul.f32.gmra.mxu0 %v194
    %v588 = vpop.f32.mrf.mxu0
    %v589 = vadd.f32 %v519, %v588
    %590 = vmatmul.f32.gmra.mxu0 %v195
    %v591 = vpop.f32.mrf.mxu0
    %v592 = vadd.f32 %v519, %v591
    %593 = vmatmul.f32.gmra.mxu0 %v196
    %v594 = vpop.f32.mrf.mxu0
    %v595 = vadd.f32 %v519, %v594
    %596 = vmatmul.f32.gmra.mxu0 %v197
    %v597 = vpop.f32.mrf.mxu0
    %v598 = vadd.f32 %v519, %v597
    %599 = vmatmul.f32.gmra.mxu0 %v198
    %v600 = vpop.f32.mrf.mxu0
    %v601 = vadd.f32 %v519, %v600
    %602 = vmatmul.f32.gmra.mxu0 %v199
    %v603 = vpop.f32.mrf.mxu0
    %v604 = vadd.f32 %v519, %v603
    %605 = vmatmul.f32.gmra.mxu0 %v200
    %v606 = vpop.f32.mrf.mxu0
    %v607 = vadd.f32 %v519, %v606
    %608 = vdwg.mxu0
    %609 = vmatpush.msra.mxu0 %v485
    %610 = vmatpush.msra.mxu0 %v484
    %611 = vmatpush.msra.mxu0 %v483
    %612 = vmatpush.msra.mxu0 %v482
    %613 = vmatpush.msra.mxu0 %v481
    %614 = vmatpush.msra.mxu0 %v480
    %615 = vmatpush.msra.mxu0 %v479
    %616 = vmatpush.msra.mxu0 %v478
    %617 = vmatpush.msra.mxu0 %v477
    %618 = vmatpush.msra.mxu0 %v476
    %619 = vmatpush.msra.mxu0 %v475
    %620 = vmatpush.msra.mxu0 %v474
    %621 = vmatpush.msra.mxu0 %v473
    %622 = vmatpush.msra.mxu0 %v472
    %623 = vmatpush.msra.mxu0 %v471
    %624 = vmatpush.msra.mxu0 %v470
    %625 = vmatmul.f32.gmra.mxu0 %v235
    %v626 = vpop.f32.mrf.mxu0
    %v627 = vadd.f32 %v538, %v626
    %628 = vmatmul.f32.gmra.mxu0 %v237
    %v629 = vpop.f32.mrf.mxu0
    %v630 = vadd.f32 %v541, %v629
    %631 = vmatmul.f32.gmra.mxu0 %v239
    %v632 = vpop.f32.mrf.mxu0
    %v633 = vadd.f32 %v544, %v632
    %634 = vmatmul.f32.gmra.mxu0 %v241
    %v635 = vpop.f32.mrf.mxu0
    %v636 = vadd.f32 %v547, %v635
    %637 = vmatmul.f32.gmra.mxu0 %v243
    %v638 = vpop.f32.mrf.mxu0
    %v639 = vadd.f32 %v550, %v638
    %640 = vmatmul.f32.gmra.mxu0 %v245
    %v641 = vpop.f32.mrf.mxu0
    %v642 = vadd.f32 %v553, %v641
    %643 = vmatmul.f32.gmra.mxu0 %v247
    %v644 = vpop.f32.mrf.mxu0
    %v645 = vadd.f32 %v556, %v644
    %646 = vmatmul.f32.gmra.mxu0 %v249
    %v647 = vpop.f32.mrf.mxu0
    %v648 = vadd.f32 %v559, %v647
    %649 = vmatmul.f32.gmra.mxu0 %v251
    %v650 = vpop.f32.mrf.mxu0
    %v651 = vadd.f32 %v562, %v650
    %652 = vmatmul.f32.gmra.mxu0 %v253
    %v653 = vpop.f32.mrf.mxu0
    %v654 = vadd.f32 %v565, %v653
    %655 = vmatmul.f32.gmra.mxu0 %v255
    %v656 = vpop.f32.mrf.mxu0
    %v657 = vadd.f32 %v568, %v656
    %658 = vmatmul.f32.gmra.mxu0 %v257
    %v659 = vpop.f32.mrf.mxu0
    %v660 = vadd.f32 %v571, %v659
    %661 = vmatmul.f32.gmra.mxu0 %v259
    %v662 = vpop.f32.mrf.mxu0
    %v663 = vadd.f32 %v574, %v662
    %664 = vmatmul.f32.gmra.mxu0 %v261
    %v665 = vpop.f32.mrf.mxu0
    %v666 = vadd.f32 %v577, %v665
    %667 = vmatmul.f32.gmra.mxu0 %v263
    %v668 = vpop.f32.mrf.mxu0
    %v669 = vadd.f32 %v580, %v668
    %670 = vmatmul.f32.gmra.mxu0 %v265
    %v671 = vpop.f32.mrf.mxu0
    %v672 = vadd.f32 %v583, %v671
    %673 = vmatmul.f32.gmra.mxu0 %v267
    %v674 = vpop.f32.mrf.mxu0
    %v675 = vadd.f32 %v586, %v674
    %676 = vmatmul.f32.gmra.mxu0 %v269
    %v677 = vpop.f32.mrf.mxu0
    %v678 = vadd.f32 %v589, %v677
    %679 = vmatmul.f32.gmra.mxu0 %v271
    %v680 = vpop.f32.mrf.mxu0
    %v681 = vadd.f32 %v592, %v680
    %682 = vmatmul.f32.gmra.mxu0 %v273
    %v683 = vpop.f32.mrf.mxu0
    %v684 = vadd.f32 %v595, %v683
    %685 = vmatmul.f32.gmra.mxu0 %v275
    %v686 = vpop.f32.mrf.mxu0
    %v687 = vadd.f32 %v598, %v686
    %688 = vmatmul.f32.gmra.mxu0 %v277
    %v689 = vpop.f32.mrf.mxu0
    %v690 = vadd.f32 %v601, %v689
    %691 = vmatmul.f32.gmra.mxu0 %v279
    %v692 = vpop.f32.mrf.mxu0
    %v693 = vadd.f32 %v604, %v692
    %694 = vmatmul.f32.gmra.mxu0 %v281
    %v695 = vpop.f32.mrf.mxu0
    %v696 = vadd.f32 %v607, %v695
    %697 = vdwg.mxu0
    %698 = vmatpush.msra.mxu0 %v501
    %699 = vmatpush.msra.mxu0 %v500
    %700 = vmatpush.msra.mxu0 %v499
    %701 = vmatpush.msra.mxu0 %v498
    %702 = vmatpush.msra.mxu0 %v497
    %703 = vmatpush.msra.mxu0 %v496
    %704 = vmatpush.msra.mxu0 %v495
    %705 = vmatpush.msra.mxu0 %v494
    %706 = vmatpush.msra.mxu0 %v493
    %707 = vmatpush.msra.mxu0 %v492
    %708 = vmatpush.msra.mxu0 %v491
    %709 = vmatpush.msra.mxu0 %v490
    %710 = vmatpush.msra.mxu0 %v489
    %711 = vmatpush.msra.mxu0 %v488
    %712 = vmatpush.msra.mxu0 %v487
    %713 = vmatpush.msra.mxu0 %v486
    %714 = vmatmul.f32.gmra.mxu0 %v309
    %v715 = vpop.f32.mrf.mxu0
    %v716 = vadd.f32 %v627, %v715
    %717 = vmatmul.f32.gmra.mxu0 %v311
    %v718 = vpop.f32.mrf.mxu0
    %v719 = vadd.f32 %v630, %v718
    %720 = vmatmul.f32.gmra.mxu0 %v313
    %v721 = vpop.f32.mrf.mxu0
    %v722 = vadd.f32 %v633, %v721
    %723 = vmatmul.f32.gmra.mxu0 %v315
    %v724 = vpop.f32.mrf.mxu0
    %v725 = vadd.f32 %v636, %v724
    %726 = vmatmul.f32.gmra.mxu0 %v317
    %v727 = vpop.f32.mrf.mxu0
    %v728 = vadd.f32 %v639, %v727
    %729 = vmatmul.f32.gmra.mxu0 %v319
    %v730 = vpop.f32.mrf.mxu0
    %v731 = vadd.f32 %v642, %v730
    %732 = vmatmul.f32.gmra.mxu0 %v321
    %v733 = vpop.f32.mrf.mxu0
    %v734 = vadd.f32 %v645, %v733
    %735 = vmatmul.f32.gmra.mxu0 %v323
    %v736 = vpop.f32.mrf.mxu0
    %v737 = vadd.f32 %v648, %v736
    %738 = vmatmul.f32.gmra.mxu0 %v325
    %v739 = vpop.f32.mrf.mxu0
    %v740 = vadd.f32 %v651, %v739
    %741 = vmatmul.f32.gmra.mxu0 %v327
    %v742 = vpop.f32.mrf.mxu0
    %v743 = vadd.f32 %v654, %v742
    %744 = vmatmul.f32.gmra.mxu0 %v329
    %v745 = vpop.f32.mrf.mxu0
    %v746 = vadd.f32 %v657, %v745
    %747 = vmatmul.f32.gmra.mxu0 %v331
    %v748 = vpop.f32.mrf.mxu0
    %v749 = vadd.f32 %v660, %v748
    %750 = vmatmul.f32.gmra.mxu0 %v333
    %v751 = vpop.f32.mrf.mxu0
    %v752 = vadd.f32 %v663, %v751
    %753 = vmatmul.f32.gmra.mxu0 %v335
    %v754 = vpop.f32.mrf.mxu0
    %v755 = vadd.f32 %v666, %v754
    %756 = vmatmul.f32.gmra.mxu0 %v337
    %v757 = vpop.f32.mrf.mxu0
    %v758 = vadd.f32 %v669, %v757
    %759 = vmatmul.f32.gmra.mxu0 %v339
    %v760 = vpop.f32.mrf.mxu0
    %v761 = vadd.f32 %v672, %v760
    %762 = vmatmul.f32.gmra.mxu0 %v341
    %v763 = vpop.f32.mrf.mxu0
    %v764 = vadd.f32 %v675, %v763
    %765 = vmatmul.f32.gmra.mxu0 %v343
    %v766 = vpop.f32.mrf.mxu0
    %v767 = vadd.f32 %v678, %v766
    %768 = vmatmul.f32.gmra.mxu0 %v345
    %v769 = vpop.f32.mrf.mxu0
    %v770 = vadd.f32 %v681, %v769
    %771 = vmatmul.f32.gmra.mxu0 %v347
    %v772 = vpop.f32.mrf.mxu0
    %v773 = vadd.f32 %v684, %v772
    %774 = vmatmul.f32.gmra.mxu0 %v349
    %v775 = vpop.f32.mrf.mxu0
    %v776 = vadd.f32 %v687, %v775
    %777 = vmatmul.f32.gmra.mxu0 %v351
    %v778 = vpop.f32.mrf.mxu0
    %v779 = vadd.f32 %v690, %v778
    %780 = vmatmul.f32.gmra.mxu0 %v353
    %v781 = vpop.f32.mrf.mxu0
    %v782 = vadd.f32 %v693, %v781
    %783 = vmatmul.f32.gmra.mxu0 %v355
    %v784 = vpop.f32.mrf.mxu0
    %v785 = vadd.f32 %v696, %v784
    %786 = vdwg.mxu0
    %787 = vmatpush.msra.mxu0 %v517
    %788 = vmatpush.msra.mxu0 %v516
    %789 = vmatpush.msra.mxu0 %v515
    %790 = vmatpush.msra.mxu0 %v514
    %791 = vmatpush.msra.mxu0 %v513
    %792 = vmatpush.msra.mxu0 %v512
    %793 = vmatpush.msra.mxu0 %v511
    %794 = vmatpush.msra.mxu0 %v510
    %795 = vmatpush.msra.mxu0 %v509
    %796 = vmatpush.msra.mxu0 %v508
    %797 = vmatpush.msra.mxu0 %v507
    %798 = vmatpush.msra.mxu0 %v506
    %799 = vmatpush.msra.mxu0 %v505
    %800 = vmatpush.msra.mxu0 %v504
    %801 = vmatpush.msra.mxu0 %v503
    %802 = vmatpush.msra.mxu0 %v502
    %803 = vmatmul.f32.gmra.mxu0 %v383
    %v804 = vpop.f32.mrf.mxu0
    %v805 = vadd.f32 %v716, %v804
    %806 = vmatmul.f32.gmra.mxu0 %v385
    %v807 = vpop.f32.mrf.mxu0
    %v808 = vadd.f32 %v719, %v807
    %809 = vmatmul.f32.gmra.mxu0 %v387
    %v810 = vpop.f32.mrf.mxu0
    %v811 = vadd.f32 %v722, %v810
    %812 = vmatmul.f32.gmra.mxu0 %v389
    %v813 = vpop.f32.mrf.mxu0
    %v814 = vadd.f32 %v725, %v813
    %815 = vmatmul.f32.gmra.mxu0 %v391
    %v816 = vpop.f32.mrf.mxu0
    %v817 = vadd.f32 %v728, %v816
    %818 = vmatmul.f32.gmra.mxu0 %v393
    %v819 = vpop.f32.mrf.mxu0
    %v820 = vadd.f32 %v731, %v819
    %821 = vmatmul.f32.gmra.mxu0 %v395
    %v822 = vpop.f32.mrf.mxu0
    %v823 = vadd.f32 %v734, %v822
    %824 = vmatmul.f32.gmra.mxu0 %v397
    %v825 = vpop.f32.mrf.mxu0
    %v826 = vadd.f32 %v737, %v825
    %827 = vmatmul.f32.gmra.mxu0 %v399
    %v828 = vpop.f32.mrf.mxu0
    %v829 = vadd.f32 %v740, %v828
    %830 = vmatmul.f32.gmra.mxu0 %v401
    %v831 = vpop.f32.mrf.mxu0
    %v832 = vadd.f32 %v743, %v831
    %833 = vmatmul.f32.gmra.mxu0 %v403
    %v834 = vpop.f32.mrf.mxu0
    %v835 = vadd.f32 %v746, %v834
    %836 = vmatmul.f32.gmra.mxu0 %v405
    %v837 = vpop.f32.mrf.mxu0
    %v838 = vadd.f32 %v749, %v837
    %839 = vmatmul.f32.gmra.mxu0 %v407
    %v840 = vpop.f32.mrf.mxu0
    %v841 = vadd.f32 %v752, %v840
    %842 = vmatmul.f32.gmra.mxu0 %v409
    %v843 = vpop.f32.mrf.mxu0
    %v844 = vadd.f32 %v755, %v843
    %845 = vmatmul.f32.gmra.mxu0 %v411
    %v846 = vpop.f32.mrf.mxu0
    %v847 = vadd.f32 %v758, %v846
    %848 = vmatmul.f32.gmra.mxu0 %v413
    %v849 = vpop.f32.mrf.mxu0
    %v850 = vadd.f32 %v761, %v849
    %851 = vmatmul.f32.gmra.mxu0 %v415
    %v852 = vpop.f32.mrf.mxu0
    %v853 = vadd.f32 %v764, %v852
    %854 = vmatmul.f32.gmra.mxu0 %v417
    %v855 = vpop.f32.mrf.mxu0
    %v856 = vadd.f32 %v767, %v855
    %857 = vmatmul.f32.gmra.mxu0 %v419
    %v858 = vpop.f32.mrf.mxu0
    %v859 = vadd.f32 %v770, %v858
    %860 = vmatmul.f32.gmra.mxu0 %v421
    %v861 = vpop.f32.mrf.mxu0
    %v862 = vadd.f32 %v773, %v861
    %863 = vmatmul.f32.gmra.mxu0 %v423
    %v864 = vpop.f32.mrf.mxu0
    %v865 = vadd.f32 %v776, %v864
    %866 = vmatmul.f32.gmra.mxu0 %v425
    %v867 = vpop.f32.mrf.mxu0
    %v868 = vadd.f32 %v779, %v867
    %869 = vmatmul.f32.gmra.mxu0 %v427
    %v870 = vpop.f32.mrf.mxu0
    %v871 = vadd.f32 %v782, %v870
    %872 = vmatmul.f32.gmra.mxu0 %v429
    %v873 = vpop.f32.mrf.mxu0
    %v874 = vadd.f32 %v785, %v873
    %875 = vdwg.mxu0
    %v876 = vmax.f32 %v805, 0.0
    %v877 = vmax.f32 %v808, 0.0
    %v878 = vmax.f32 %v811, 0.0
    %v879 = vmax.f32 %v814, 0.0
    %v880 = vmax.f32 %v817, 0.0
    %v881 = vmax.f32 %v820, 0.0
    %v882 = vmax.f32 %v823, 0.0
    %v883 = vmax.f32 %v826, 0.0
    %v884 = vmax.f32 %v829, 0.0
    %v885 = vmax.f32 %v832, 0.0
    %v886 = vmax.f32 %v835, 0.0
    %v887 = vmax.f32 %v838, 0.0
    %v888 = vmax.f32 %v841, 0.0
    %v889 = vmax.f32 %v844, 0.0
    %v890 = vmax.f32 %v847, 0.0
    %v891 = vmax.f32 %v850, 0.0
    %v892 = vmax.f32 %v853, 0.0
    %v893 = vmax.f32 %v856, 0.0
    %v894 = vmax.f32 %v859, 0.0
    %v895 = vmax.f32 %v862, 0.0
    %v896 = vmax.f32 %v865, 0.0
    %v897 = vmax.f32 %v868, 0.0
    %v898 = vmax.f32 %v871, 0.0
    %v899 = vmax.f32 %v874, 0.0
    %v900 = vlaneseq
    %v901 = vshrl.u32 %v900, 7
    %v902 = vadd.s32 %v901, 8
    %vm903 = vcmp.ge.s32.totalorder %v56, 8
    %v904 = vsel %vm903, 1, 0
    %v905 = vsub.s32 14, %v904
    %vm906 = vcmp.ge.s32.totalorder %v56, 16
    %v907 = vsel %vm906, 1, 0
    %v908 = vsub.s32 %v905, %v907
    %vm909 = vcmp.le.s32.totalorder %v901, %v908
    %vm910 = vcmp.le.s32.totalorder %v902, %v908
    %v911 = vsel %vm909, 1, 0
    %v912 = vsel %vm910, 1, 0
    %vm913 = vcmp.eq.s32.totalorder %v911, 1
    %vm914 = vcmp.eq.s32.totalorder %v912, 1
    %v915 = vsel %vm913, %v876, 0.0
    %v916 = vsel %vm914, %v877, 0.0
    %v917 = vsel %vm913, %v878, 0.0
    %v918 = vsel %vm914, %v879, 0.0
    %v919 = vsel %vm913, %v880, 0.0
    %v920 = vsel %vm914, %v881, 0.0
    %v921 = vsel %vm913, %v882, 0.0
    %v922 = vsel %vm914, %v883, 0.0
    %v923 = vsel %vm913, %v884, 0.0
    %v924 = vsel %vm914, %v885, 0.0
    %v925 = vsel %vm913, %v886, 0.0
    %v926 = vsel %vm914, %v887, 0.0
    %v927 = vsel %vm913, %v888, 0.0
    %v928 = vsel %vm914, %v889, 0.0
    %v929 = vsel %vm913, %v890, 0.0
    %v930 = vsel %vm914, %v891, 0.0
    %v931 = vsel %vm913, %v892, 0.0
    %v932 = vsel %vm914, %v893, 0.0
    %v933 = vsel %vm913, %v894, 0.0
    %v934 = vsel %vm914, %v895, 0.0
    %v935 = vsel %vm913, %v896, 0.0
    %v936 = vsel %vm914, %v897, 0.0
    %v937 = vsel %vm913, %v898, 0.0
    %v938 = vsel %vm914, %v899, 0.0
    %vm939 = vcmask 195584
    %v940 = vsel %vm939, %v915, -inf
    %v941 = vsel %vm939, %v916, -inf
    %v942 = vmax.f32 %v940, %v941
    %v943 = vrot.slane %v942, 4
    %v944 = vmax.f32 %v942, %v943
    %v945 = vrot.slane %v944, 2
    %v946 = vmax.f32 %v944, %v945
    %v947 = vrot.slane %v946, 1
    %v948 = vmax.f32 %v946, %v947
    %v949 = vsel %vm939, %v917, -inf
    %v950 = vsel %vm939, %v918, -inf
    %v951 = vmax.f32 %v949, %v950
    %v952 = vrot.slane %v951, 4
    %v953 = vmax.f32 %v951, %v952
    %v954 = vrot.slane %v953, 2
    %v955 = vmax.f32 %v953, %v954
    %v956 = vrot.slane %v955, 1
    %v957 = vmax.f32 %v955, %v956
    %v958 = vsel %vm939, %v919, -inf
    %v959 = vsel %vm939, %v920, -inf
    %v960 = vmax.f32 %v958, %v959
    %v961 = vrot.slane %v960, 4
    %v962 = vmax.f32 %v960, %v961
    %v963 = vrot.slane %v962, 2
    %v964 = vmax.f32 %v962, %v963
    %v965 = vrot.slane %v964, 1
    %v966 = vmax.f32 %v964, %v965
    %v967 = vsel %vm939, %v921, -inf
    %v968 = vsel %vm939, %v922, -inf
    %v969 = vmax.f32 %v967, %v968
    %v970 = vrot.slane %v969, 4
    %v971 = vmax.f32 %v969, %v970
    %v972 = vrot.slane %v971, 2
    %v973 = vmax.f32 %v971, %v972
    %v974 = vrot.slane %v973, 1
    %v975 = vmax.f32 %v973, %v974
    %v976 = vsel %vm939, %v923, -inf
    %v977 = vsel %vm939, %v924, -inf
    %v978 = vmax.f32 %v976, %v977
    %v979 = vrot.slane %v978, 4
    %v980 = vmax.f32 %v978, %v979
    %v981 = vrot.slane %v980, 2
    %v982 = vmax.f32 %v980, %v981
    %v983 = vrot.slane %v982, 1
    %v984 = vmax.f32 %v982, %v983
    %v985 = vsel %vm939, %v925, -inf
    %v986 = vsel %vm939, %v926, -inf
    %v987 = vmax.f32 %v985, %v986
    %v988 = vrot.slane %v987, 4
    %v989 = vmax.f32 %v987, %v988
    %v990 = vrot.slane %v989, 2
    %v991 = vmax.f32 %v989, %v990
    %v992 = vrot.slane %v991, 1
    %v993 = vmax.f32 %v991, %v992
    %v994 = vsel %vm939, %v927, -inf
    %v995 = vsel %vm939, %v928, -inf
    %v996 = vmax.f32 %v994, %v995
    %v997 = vrot.slane %v996, 4
    %v998 = vmax.f32 %v996, %v997
    %v999 = vrot.slane %v998, 2
    %v1000 = vmax.f32 %v998, %v999
    %v1001 = vrot.slane %v1000, 1
    %v1002 = vmax.f32 %v1000, %v1001
    %v1003 = vsel %vm939, %v929, -inf
    %v1004 = vsel %vm939, %v930, -inf
    %v1005 = vmax.f32 %v1003, %v1004
    %v1006 = vrot.slane %v1005, 4
    %v1007 = vmax.f32 %v1005, %v1006
    %v1008 = vrot.slane %v1007, 2
    %v1009 = vmax.f32 %v1007, %v1008
    %v1010 = vrot.slane %v1009, 1
    %v1011 = vmax.f32 %v1009, %v1010
    %v1012 = vsel %vm939, %v931, -inf
    %v1013 = vsel %vm939, %v932, -inf
    %v1014 = vmax.f32 %v1012, %v1013
    %v1015 = vrot.slane %v1014, 4
    %v1016 = vmax.f32 %v1014, %v1015
    %v1017 = vrot.slane %v1016, 2
    %v1018 = vmax.f32 %v1016, %v1017
    %v1019 = vrot.slane %v1018, 1
    %v1020 = vmax.f32 %v1018, %v1019
    %v1021 = vsel %vm939, %v933, -inf
    %v1022 = vsel %vm939, %v934, -inf
    %v1023 = vmax.f32 %v1021, %v1022
    %v1024 = vrot.slane %v1023, 4
    %v1025 = vmax.f32 %v1023, %v1024
    %v1026 = vrot.slane %v1025, 2
    %v1027 = vmax.f32 %v1025, %v1026
    %v1028 = vrot.slane %v1027, 1
    %v1029 = vmax.f32 %v1027, %v1028
    %v1030 = vsel %vm939, %v935, -inf
    %v1031 = vsel %vm939, %v936, -inf
    %v1032 = vmax.f32 %v1030, %v1031
    %v1033 = vrot.slane %v1032, 4
    %v1034 = vmax.f32 %v1032, %v1033
    %v1035 = vrot.slane %v1034, 2
    %v1036 = vmax.f32 %v1034, %v1035
    %v1037 = vrot.slane %v1036, 1
    %v1038 = vmax.f32 %v1036, %v1037
    %v1039 = vsel %vm939, %v937, -inf
    %v1040 = vsel %vm939, %v938, -inf
    %v1041 = vmax.f32 %v1039, %v1040
    %v1042 = vrot.slane %v1041, 4
    %v1043 = vmax.f32 %v1041, %v1042
    %v1044 = vrot.slane %v1043, 2
    %v1045 = vmax.f32 %v1043, %v1044
    %v1046 = vrot.slane %v1045, 1
    %v1047 = vmax.f32 %v1045, %v1046
    %v1048 = vld [vmem:[#allocation2 + $0x208] sm:$0xff]
    %v1049 = vld [vmem:[#allocation2 + $0x210] sm:$0xff]
    %v1050 = vld [vmem:[#allocation2 + $0x218] sm:$0xff]
    %v1051 = vld [vmem:[#allocation2 + $0x220] sm:$0xff]
    %v1052 = vld [vmem:[#allocation2 + $0x228] sm:$0xff]
    %v1053 = vld [vmem:[#allocation2 + $0x230] sm:$0xff]
    %v1054 = vld [vmem:[#allocation2 + $0x238] sm:$0x1]
    %v1055 = vld [vmem:[#allocation2 + $0x240] sm:$0x1]
    %v1056 = vperm.slane %v1054, 0
    %v1057 = vperm.slane %v1055, 0
    %vm1070 = vcmask 1041409
    %v1071 = vsel %vm1070, %v957, %v948
    %vm1072 = vcmask 1042434
    %v1073 = vsel %vm1072, %v966, %v1071
    %vm1074 = vcmask 1043459
    %v1075 = vsel %vm1074, %v975, %v1073
    %vm1076 = vcmask 1044484
    %v1077 = vsel %vm1076, %v984, %v1075
    %vm1078 = vcmask 1045509
    %v1079 = vsel %vm1078, %v993, %v1077
    %vm1080 = vcmask 1046534
    %v1081 = vsel %vm1080, %v1002, %v1079
    %vm1082 = vcmask 1047559
    %v1083 = vsel %vm1082, %v1011, %v1081
    %v1084 = vsel %vm1070, %v1029, %v1020
    %v1085 = vsel %vm1072, %v1038, %v1084
    %v1086 = vsel %vm1074, %v1047, %v1085
    %v1087 = vsel %vm939, %v1083, 0
    %v1089 = vsel %vm939, %v1086, 0
    %1091 = vmatpush.msra.mxu0 0.0
    %1092 = vmatpush.msra.mxu0 0.0
    %1093 = vmatpush.msra.mxu0 0.0
    %1094 = vmatpush.msra.mxu0 0.0
    %1095 = vmatpush.msra.mxu0 0.0
    %1096 = vmatpush.msra.mxu0 0.0
    %1097 = vmatpush.msra.mxu0 0.0
    %1098 = vmatpush.msra.mxu0 0.0
    %1099 = vmatpush.msra.mxu0 0.0
    %1100 = vmatpush.msra.mxu0 0.0
    %1101 = vmatpush.msra.mxu0 0.0
    %1102 = vmatpush.msra.mxu0 0.0
    %1103 = vmatpush.msra.mxu0 0.0
    %1104 = vmatpush.msra.mxu0 %v1050
    %1105 = vmatpush.msra.mxu0 %v1049
    %1106 = vmatpush.msra.mxu0 %v1048
    %1107 = vmatmul.f32.gmra.mxu0 %v1087
    %v1108 = vpop.f32.mrf.mxu0
    %v1109 = vadd.f32 %v1056, %v1108
    %1110 = vmatmul.f32.gmra.mxu0 %v1089
    %v1111 = vpop.f32.mrf.mxu0
    %v1112 = vadd.f32 %v1056, %v1111
    %1113 = vdwg.mxu0
    %1114 = vmatpush.msra.mxu0 0.0
    %1115 = vmatpush.msra.mxu0 0.0
    %1116 = vmatpush.msra.mxu0 0.0
    %1117 = vmatpush.msra.mxu0 0.0
    %1118 = vmatpush.msra.mxu0 0.0
    %1119 = vmatpush.msra.mxu0 0.0
    %1120 = vmatpush.msra.mxu0 0.0
    %1121 = vmatpush.msra.mxu0 0.0
    %1122 = vmatpush.msra.mxu0 0.0
    %1123 = vmatpush.msra.mxu0 0.0
    %1124 = vmatpush.msra.mxu0 0.0
    %1125 = vmatpush.msra.mxu0 0.0
    %1126 = vmatpush.msra.mxu0 0.0
    %1127 = vmatpush.msra.mxu0 %v1053
    %1128 = vmatpush.msra.mxu0 %v1052
    %1129 = vmatpush.msra.mxu0 %v1051
    %1130 = vmatmul.f32.gmra.mxu0 %v1087
    %v1131 = vpop.f32.mrf.mxu0
    %v1132 = vadd.f32 %v1057, %v1131
    %1133 = vmatmul.f32.gmra.mxu0 %v1089
    %v1134 = vpop.f32.mrf.mxu0
    %v1135 = vadd.f32 %v1057, %v1134
    %1136 = vdwg.mxu0
    %v1138 = vrot.slane %v1135, 2
    %v1140 = vadd.f32 %v1109, %v1138
    %v1141 = vrot.slane %v1135, 6
    %v1143 = vadd.f32 %v1109, %v1141
    %v1145 = vrot.slane %v1132, 2
    %v1147 = vadd.f32 %v1109, %v1145
    %v1148 = vrot.slane %v1132, 6
    %v1150 = vadd.f32 %v1109, %v1148
    %v1151 = vadd.f32 %v1112, %v1145
    %v1152 = vadd.f32 %v1112, %v1148
    %v1153 = vld [vmem:[#allocation2 + $0x248] sm:$0xff]
    %v1154 = vld [vmem:[#allocation2 + $0x250] sm:$0xff]
    %v1155 = vld [vmem:[#allocation2 + $0x258] sm:$0xff]
    %v1156 = vld [vmem:[#allocation2 + $0x260] sm:$0xff]
    %v1157 = vld [vmem:[%s2] sm:$0x3]
    %v1158 = vld [vmem:[%s2 + $0x8] sm:$0x3]
    %vm1159 = vcmask 261120
    %v1161 = vsel %vm1159, %v1157, 0
    %1163 = vmatpush.msra.mxu0 0.0
    %1164 = vmatpush.msra.mxu0 0.0
    %1165 = vmatpush.msra.mxu0 0.0
    %1166 = vmatpush.msra.mxu0 0.0
    %1167 = vmatpush.msra.mxu0 0.0
    %1168 = vmatpush.msra.mxu0 0.0
    %1169 = vmatpush.msra.mxu0 0.0
    %1170 = vmatpush.msra.mxu0 0.0
    %1171 = vmatpush.msra.mxu0 0.0
    %1172 = vmatpush.msra.mxu0 0.0
    %1173 = vmatpush.msra.mxu0 0.0
    %1174 = vmatpush.msra.mxu0 0.0
    %1175 = vmatpush.msra.mxu0 %v1156
    %1176 = vmatpush.msra.mxu0 %v1155
    %1177 = vmatpush.msra.mxu0 %v1154
    %1178 = vmatpush.msra.mxu0 %v1153
    %1179 = vmatmul.f32.gmra.mxu0 %v1161
    %v1180 = vpop.f32.mrf.mxu0
    %v1181 = vadd.f32 %v1140, %v1180
    %1182 = vdwg.mxu0
    %v1183 = vxor.u32 %v1181, 2147483648
    %v1184 = vmul.f32 %v1183, 1.442695
    %v1185 = vpow.pop %v1184
    %v1186 = vadd.f32 %v1185, 1.0
    %v1187 = vrcp.pop %v1186
    %v1188 = vmul.f32 %v1186, %v1187
    %v1189 = vsub.f32 1.0, %v1188
    %v1190 = vmul.f32 %v1187, %v1189
    %v1191 = vadd.f32 %v1187, %v1190
    %vm1192 = vweird.f32 %v1186
    %vm1193 = vweird.f32 %v1187
    %vm1194 = vmor %vm1192, %vm1193
    %v1195 = vsel %vm1194, %v1187, %v1191
    %v1196 = vand.u32 2147483647, %v1186
    %vm1197 = vcmp.eq.f32.partialorder %v1196, 8.507059e+37
    %v1198 = vand.u32 %v1186, 2147483648
    %v1199 = vor.u32 1.1754944e-38, %v1198
    %v1200 = vsel %vm1197, %v1199, %v1195
    %v1201 = vmul.f32 1.0, %v1200
    %v1202 = vtanh.pop %v1181
    %1204 = vrot.lane.b32.xlu0 %v1158, 32
    %v1205 = vpop.permute.xlu0 %1204
    %v1207 = vmul.f32 %v1201, %v1205
    %1209 = vrot.lane.b32.xlu0 %v1202, 64
    %v1210 = vpop.permute.xlu0 %1209
    %v1212 = vmul.f32 %v1201, %v1210
    %1214 = vrot.lane.b32.xlu0 %v1212, 32
    %v1215 = vpop.permute.xlu0 %1214
    %v1217 = vadd.f32 %v1207, %v1215
    %v1218 = vtanh.pop %v1217
    %1220 = vrot.lane.b32.xlu0 %v1218, 64
    %v1221 = vpop.permute.xlu0 %1220
    %v1223 = vmul.f32 %v1201, %v1221
    %1225 = vrot.lane.b32.xlu0 %v1223, 32
    %v1226 = vpop.permute.xlu0 %1225
    %v1228 = vrot.slane %v1143, 2
    %v1230 = vsel %vm1159, %v1226, 0
    %1232 = vmatpush.msra.mxu0 0.0
    %1233 = vmatpush.msra.mxu0 0.0
    %1234 = vmatpush.msra.mxu0 0.0
    %1235 = vmatpush.msra.mxu0 0.0
    %1236 = vmatpush.msra.mxu0 0.0
    %1237 = vmatpush.msra.mxu0 0.0
    %1238 = vmatpush.msra.mxu0 0.0
    %1239 = vmatpush.msra.mxu0 0.0
    %1240 = vmatpush.msra.mxu0 0.0
    %1241 = vmatpush.msra.mxu0 0.0
    %1242 = vmatpush.msra.mxu0 0.0
    %1243 = vmatpush.msra.mxu0 0.0
    %1244 = vmatpush.msra.mxu0 %v1156
    %1245 = vmatpush.msra.mxu0 %v1155
    %1246 = vmatpush.msra.mxu0 %v1154
    %1247 = vmatpush.msra.mxu0 %v1153
    %1248 = vmatmul.f32.gmra.mxu0 %v1230
    %v1249 = vpop.f32.mrf.mxu0
    %v1250 = vadd.f32 %v1228, %v1249
    %1251 = vdwg.mxu0
    %v1252 = vxor.u32 %v1250, 2147483648
    %v1253 = vmul.f32 %v1252, 1.442695
    %v1254 = vpow.pop %v1253
    %v1255 = vadd.f32 %v1254, 1.0
    %v1256 = vrcp.pop %v1255
    %v1257 = vmul.f32 %v1255, %v1256
    %v1258 = vsub.f32 1.0, %v1257
    %v1259 = vmul.f32 %v1256, %v1258
    %v1260 = vadd.f32 %v1256, %v1259
    %vm1261 = vweird.f32 %v1255
    %vm1262 = vweird.f32 %v1256
    %vm1263 = vmor %vm1261, %vm1262
    %v1264 = vsel %vm1263, %v1256, %v1260
    %v1265 = vand.u32 2147483647, %v1255
    %vm1266 = vcmp.eq.f32.partialorder %v1265, 8.507059e+37
    %v1267 = vand.u32 %v1255, 2147483648
    %v1268 = vor.u32 1.1754944e-38, %v1267
    %v1269 = vsel %vm1266, %v1268, %v1264
    %v1270 = vmul.f32 1.0, %v1269
    %v1271 = vtanh.pop %v1250
    %v1272 = vmul.f32 %v1270, %v1217
    %1274 = vrot.lane.b32.xlu0 %v1271, 64
    %v1275 = vpop.permute.xlu0 %1274
    %v1277 = vmul.f32 %v1270, %v1275
    %1279 = vrot.lane.b32.xlu0 %v1277, 32
    %v1280 = vpop.permute.xlu0 %1279
    %v1282 = vadd.f32 %v1272, %v1280
    %v1283 = vtanh.pop %v1282
    %1285 = vrot.lane.b32.xlu0 %v1283, 64
    %v1286 = vpop.permute.xlu0 %1285
    %v1288 = vmul.f32 %v1270, %v1286
    %1290 = vrot.lane.b32.xlu0 %v1288, 32
    %v1291 = vpop.permute.xlu0 %1290
    %v1293 = vrot.slane %v1147, 4
    %v1295 = vsel %vm1159, %v1291, 0
    %1297 = vmatpush.msra.mxu0 0.0
    %1298 = vmatpush.msra.mxu0 0.0
    %1299 = vmatpush.msra.mxu0 0.0
    %1300 = vmatpush.msra.mxu0 0.0
    %1301 = vmatpush.msra.mxu0 0.0
    %1302 = vmatpush.msra.mxu0 0.0
    %1303 = vmatpush.msra.mxu0 0.0
    %1304 = vmatpush.msra.mxu0 0.0
    %1305 = vmatpush.msra.mxu0 0.0
    %1306 = vmatpush.msra.mxu0 0.0
    %1307 = vmatpush.msra.mxu0 0.0
    %1308 = vmatpush.msra.mxu0 0.0
    %1309 = vmatpush.msra.mxu0 %v1156
    %1310 = vmatpush.msra.mxu0 %v1155
    %1311 = vmatpush.msra.mxu0 %v1154
    %1312 = vmatpush.msra.mxu0 %v1153
    %1313 = vmatmul.f32.gmra.mxu0 %v1295
    %v1314 = vpop.f32.mrf.mxu0
    %v1315 = vadd.f32 %v1293, %v1314
    %1316 = vdwg.mxu0
    %v1317 = vxor.u32 %v1315, 2147483648
    %v1318 = vmul.f32 %v1317, 1.442695
    %v1319 = vpow.pop %v1318
    %v1320 = vadd.f32 %v1319, 1.0
    %v1321 = vrcp.pop %v1320
    %v1322 = vmul.f32 %v1320, %v1321
    %v1323 = vsub.f32 1.0, %v1322
    %v1324 = vmul.f32 %v1321, %v1323
    %v1325 = vadd.f32 %v1321, %v1324
    %vm1326 = vweird.f32 %v1320
    %vm1327 = vweird.f32 %v1321
    %vm1328 = vmor %vm1326, %vm1327
    %v1329 = vsel %vm1328, %v1321, %v1325
    %v1330 = vand.u32 2147483647, %v1320
    %vm1331 = vcmp.eq.f32.partialorder %v1330, 8.507059e+37
    %v1332 = vand.u32 %v1320, 2147483648
    %v1333 = vor.u32 1.1754944e-38, %v1332
    %v1334 = vsel %vm1331, %v1333, %v1329
    %v1335 = vmul.f32 1.0, %v1334
    %v1336 = vtanh.pop %v1315
    %v1337 = vmul.f32 %v1335, %v1282
    %1339 = vrot.lane.b32.xlu0 %v1336, 64
    %v1340 = vpop.permute.xlu0 %1339
    %v1342 = vmul.f32 %v1335, %v1340
    %1344 = vrot.lane.b32.xlu0 %v1342, 32
    %v1345 = vpop.permute.xlu0 %1344
    %v1347 = vadd.f32 %v1337, %v1345
    %v1348 = vtanh.pop %v1347
    %1350 = vrot.lane.b32.xlu0 %v1348, 64
    %v1351 = vpop.permute.xlu0 %1350
    %v1353 = vmul.f32 %v1335, %v1351
    %1355 = vrot.lane.b32.xlu0 %v1353, 32
    %v1356 = vpop.permute.xlu0 %1355
    %v1358 = vrot.slane %v1150, 6
    %v1360 = vsel %vm1159, %v1356, 0
    %1362 = vmatpush.msra.mxu0 0.0
    %1363 = vmatpush.msra.mxu0 0.0
    %1364 = vmatpush.msra.mxu0 0.0
    %1365 = vmatpush.msra.mxu0 0.0
    %1366 = vmatpush.msra.mxu0 0.0
    %1367 = vmatpush.msra.mxu0 0.0
    %1368 = vmatpush.msra.mxu0 0.0
    %1369 = vmatpush.msra.mxu0 0.0
    %1370 = vmatpush.msra.mxu0 0.0
    %1371 = vmatpush.msra.mxu0 0.0
    %1372 = vmatpush.msra.mxu0 0.0
    %1373 = vmatpush.msra.mxu0 0.0
    %1374 = vmatpush.msra.mxu0 %v1156
    %1375 = vmatpush.msra.mxu0 %v1155
    %1376 = vmatpush.msra.mxu0 %v1154
    %1377 = vmatpush.msra.mxu0 %v1153
    %1378 = vmatmul.f32.gmra.mxu0 %v1360
    %v1379 = vpop.f32.mrf.mxu0
    %v1380 = vadd.f32 %v1358, %v1379
    %1381 = vdwg.mxu0
    %v1382 = vxor.u32 %v1380, 2147483648
    %v1383 = vmul.f32 %v1382, 1.442695
    %v1384 = vpow.pop %v1383
    %v1385 = vadd.f32 %v1384, 1.0
    %v1386 = vrcp.pop %v1385
    %v1387 = vmul.f32 %v1385, %v1386
    %v1388 = vsub.f32 1.0, %v1387
    %v1389 = vmul.f32 %v1386, %v1388
    %v1390 = vadd.f32 %v1386, %v1389
    %vm1391 = vweird.f32 %v1385
    %vm1392 = vweird.f32 %v1386
    %vm1393 = vmor %vm1391, %vm1392
    %v1394 = vsel %vm1393, %v1386, %v1390
    %v1395 = vand.u32 2147483647, %v1385
    %vm1396 = vcmp.eq.f32.partialorder %v1395, 8.507059e+37
    %v1397 = vand.u32 %v1385, 2147483648
    %v1398 = vor.u32 1.1754944e-38, %v1397
    %v1399 = vsel %vm1396, %v1398, %v1394
    %v1400 = vmul.f32 1.0, %v1399
    %v1401 = vtanh.pop %v1380
    %v1402 = vmul.f32 %v1400, %v1347
    %1404 = vrot.lane.b32.xlu0 %v1401, 64
    %v1405 = vpop.permute.xlu0 %1404
    %v1407 = vmul.f32 %v1400, %v1405
    %1409 = vrot.lane.b32.xlu0 %v1407, 32
    %v1410 = vpop.permute.xlu0 %1409
    %v1412 = vadd.f32 %v1402, %v1410
    %v1413 = vtanh.pop %v1412
    %1415 = vrot.lane.b32.xlu0 %v1413, 64
    %v1416 = vpop.permute.xlu0 %1415
    %v1418 = vmul.f32 %v1400, %v1416
    %1420 = vrot.lane.b32.xlu0 %v1418, 32
    %v1421 = vpop.permute.xlu0 %1420
    %v1422 = vsel %vm1159, %v1421, 0
    %1424 = vmatpush.msra.mxu0 0.0
    %1425 = vmatpush.msra.mxu0 0.0
    %1426 = vmatpush.msra.mxu0 0.0
    %1427 = vmatpush.msra.mxu0 0.0
    %1428 = vmatpush.msra.mxu0 0.0
    %1429 = vmatpush.msra.mxu0 0.0
    %1430 = vmatpush.msra.mxu0 0.0
    %1431 = vmatpush.msra.mxu0 0.0
    %1432 = vmatpush.msra.mxu0 0.0
    %1433 = vmatpush.msra.mxu0 0.0
    %1434 = vmatpush.msra.mxu0 0.0
    %1435 = vmatpush.msra.mxu0 0.0
    %1436 = vmatpush.msra.mxu0 %v1156
    %1437 = vmatpush.msra.mxu0 %v1155
    %1438 = vmatpush.msra.mxu0 %v1154
    %1439 = vmatpush.msra.mxu0 %v1153
    %1440 = vmatmul.f32.gmra.mxu0 %v1422
    %v1441 = vpop.f32.mrf.mxu0
    %v1442 = vadd.f32 %v1151, %v1441
    %1443 = vdwg.mxu0
    %v1444 = vxor.u32 %v1442, 2147483648
    %v1445 = vmul.f32 %v1444, 1.442695
    %v1446 = vpow.pop %v1445
    %v1447 = vadd.f32 %v1446, 1.0
    %v1448 = vrcp.pop %v1447
    %v1449 = vmul.f32 %v1447, %v1448
    %v1450 = vsub.f32 1.0, %v1449
    %v1451 = vmul.f32 %v1448, %v1450
    %v1452 = vadd.f32 %v1448, %v1451
    %vm1453 = vweird.f32 %v1447
    %vm1454 = vweird.f32 %v1448
    %vm1455 = vmor %vm1453, %vm1454
    %v1456 = vsel %vm1455, %v1448, %v1452
    %v1457 = vand.u32 2147483647, %v1447
    %vm1458 = vcmp.eq.f32.partialorder %v1457, 8.507059e+37
    %v1459 = vand.u32 %v1447, 2147483648
    %v1460 = vor.u32 1.1754944e-38, %v1459
    %v1461 = vsel %vm1458, %v1460, %v1456
    %v1462 = vmul.f32 1.0, %v1461
    %v1463 = vtanh.pop %v1442
    %v1464 = vmul.f32 %v1462, %v1412
    %1466 = vrot.lane.b32.xlu0 %v1463, 64
    %v1467 = vpop.permute.xlu0 %1466
    %v1469 = vmul.f32 %v1462, %v1467
    %1471 = vrot.lane.b32.xlu0 %v1469, 32
    %v1472 = vpop.permute.xlu0 %1471
    %v1474 = vadd.f32 %v1464, %v1472
    %v1475 = vtanh.pop %v1474
    %1477 = vrot.lane.b32.xlu0 %v1475, 64
    %v1478 = vpop.permute.xlu0 %1477
    %v1480 = vmul.f32 %v1462, %v1478
    %1482 = vrot.lane.b32.xlu0 %v1480, 32
    %v1483 = vpop.permute.xlu0 %1482
    %v1485 = vrot.slane %v1152, 2
    %v1487 = vsel %vm1159, %v1483, 0
    %1489 = vmatpush.msra.mxu0 0.0
    %1490 = vmatpush.msra.mxu0 0.0
    %1491 = vmatpush.msra.mxu0 0.0
    %1492 = vmatpush.msra.mxu0 0.0
    %1493 = vmatpush.msra.mxu0 0.0
    %1494 = vmatpush.msra.mxu0 0.0
    %1495 = vmatpush.msra.mxu0 0.0
    %1496 = vmatpush.msra.mxu0 0.0
    %1497 = vmatpush.msra.mxu0 0.0
    %1498 = vmatpush.msra.mxu0 0.0
    %1499 = vmatpush.msra.mxu0 0.0
    %1500 = vmatpush.msra.mxu0 0.0
    %1501 = vmatpush.msra.mxu0 %v1156
    %1502 = vmatpush.msra.mxu0 %v1155
    %1503 = vmatpush.msra.mxu0 %v1154
    %1504 = vmatpush.msra.mxu0 %v1153
    %1505 = vmatmul.f32.gmra.mxu0 %v1487
    %v1506 = vpop.f32.mrf.mxu0
    %v1507 = vadd.f32 %v1485, %v1506
    %1508 = vdwg.mxu0
    %v1509 = vxor.u32 %v1507, 2147483648
    %v1510 = vmul.f32 %v1509, 1.442695
    %v1511 = vpow.pop %v1510
    %v1512 = vadd.f32 %v1511, 1.0
    %v1513 = vrcp.pop %v1512
    %v1514 = vmul.f32 %v1512, %v1513
    %v1515 = vsub.f32 1.0, %v1514
    %v1516 = vmul.f32 %v1513, %v1515
    %v1517 = vadd.f32 %v1513, %v1516
    %vm1518 = vweird.f32 %v1512
    %vm1519 = vweird.f32 %v1513
    %vm1520 = vmor %vm1518, %vm1519
    %v1521 = vsel %vm1520, %v1513, %v1517
    %v1522 = vand.u32 2147483647, %v1512
    %vm1523 = vcmp.eq.f32.partialorder %v1522, 8.507059e+37
    %v1524 = vand.u32 %v1512, 2147483648
    %v1525 = vor.u32 1.1754944e-38, %v1524
    %v1526 = vsel %vm1523, %v1525, %v1521
    %v1527 = vmul.f32 1.0, %v1526
    %v1528 = vtanh.pop %v1507
    %v1529 = vmul.f32 %v1527, %v1474
    %1531 = vrot.lane.b32.xlu0 %v1528, 64
    %v1532 = vpop.permute.xlu0 %1531
    %v1534 = vmul.f32 %v1527, %v1532
    %1536 = vrot.lane.b32.xlu0 %v1534, 32
    %v1537 = vpop.permute.xlu0 %1536
    %v1539 = vadd.f32 %v1529, %v1537
    %v1540 = vtanh.pop %v1539
    %1542 = vrot.lane.b32.xlu0 %v1540, 64
    %v1543 = vpop.permute.xlu0 %1542
    %v1545 = vmul.f32 %v1527, %v1543
    %1547 = vrot.lane.b32.xlu0 %v1545, 16
    %v1548 = vpop.permute.xlu0 %1547
    %1550 = vrot.lane.b32.xlu0 %v1545, 48
    %v1551 = vpop.permute.xlu0 %1550
    %vm1553 = vcmask 130048
    %v1554 = vsel %vm1553, %v1548, %v1551
    %v1555 = vld [vmem:[%s2 + $0x10] sm:$0x3]
    %v1556 = vmul.f32 %v1555, %v1555
    %vm1557 = vcmask 58368
    %v1558 = vsel %vm1557, %v1556, 0.0
    %1559 = vadd.xlane.f32.xlu0 %v1558
    %v1560 = vpop.xlane.xlu0 %1559
    %v1561 = vrsqrt.pop %v1560
    %v1562 = vmul.f32 %v1561, %v1560
    %v1563 = vmul.f32 %v1562, %v1561
    %v1564 = vmul.f32 0.5, %v1563
    %v1565 = vsub.f32 1.5, %v1564
    %v1566 = vmul.f32 %v1561, %v1565
    %v1567 = vmul.f32 %v1560, %v1566
    %vm1568 = vcmp.eq.f32.partialorder %v1560, inf
    %v1569 = vsel %vm1568, %v1560, %v1567
    %vm1570 = vcmp.eq.f32.partialorder %v1560, 0.0
    %v1571 = vand.u32 %v1560, 2147483648
    %v1572 = vsel %vm1570, %v1571, %v1569
    %v1573 = vld [vmem:[%s2 + $0x18] sm:$0x3]
    %v1574 = vmul.f32 %v1573, %v1573
    %v1575 = vsel %vm1557, %v1574, 0.0
    %1576 = vadd.xlane.f32.xlu0 %v1575
    %v1577 = vpop.xlane.xlu0 %1576
    %v1578 = vrsqrt.pop %v1577
    %v1579 = vmul.f32 %v1578, %v1577
    %v1580 = vmul.f32 %v1579, %v1578
    %v1581 = vmul.f32 0.5, %v1580
    %v1582 = vsub.f32 1.5, %v1581
    %v1583 = vmul.f32 %v1578, %v1582
    %v1584 = vmul.f32 %v1577, %v1583
    %vm1585 = vcmp.eq.f32.partialorder %v1577, inf
    %v1586 = vsel %vm1585, %v1577, %v1584
    %vm1587 = vcmp.eq.f32.partialorder %v1577, 0.0
    %v1588 = vand.u32 %v1577, 2147483648
    %v1589 = vsel %vm1587, %v1588, %v1586
    %v1590 = vmul.f32 %v1555, %v1573
    %v1591 = vsel %vm1557, %v1590, 0.0
    %1592 = vadd.xlane.f32.xlu0 %v1591
    %v1593 = vpop.xlane.xlu0 %1592
    %v1594 = vmul.f32 %v1572, %v1589
    %v1595 = vmax.f32 %v1594, 1e-06
    %v1596 = vrcp.pop %v1595
    %v1597 = vmul.f32 %v1595, %v1596
    %v1598 = vsub.f32 1.0, %v1597
    %v1599 = vmul.f32 %v1596, %v1598
    %v1600 = vadd.f32 %v1596, %v1599
    %vm1601 = vweird.f32 %v1595
    %vm1602 = vweird.f32 %v1596
    %vm1603 = vmor %vm1601, %vm1602
    %v1604 = vsel %vm1603, %v1596, %v1600
    %v1605 = vand.u32 2147483647, %v1595
    %vm1606 = vcmp.eq.f32.partialorder %v1605, 8.507059e+37
    %v1607 = vand.u32 %v1595, 2147483648
    %v1608 = vor.u32 1.1754944e-38, %v1607
    %v1609 = vsel %vm1606, %v1608, %v1604
    %v1610 = vmul.f32 %v1593, %v1609
    %1612 = vrot.lane.b32.xlu0 %v1574, 120
    %v1613 = vpop.permute.xlu0 %1612
    %v1615 = vsel %vm1557, %v1613, 0.0
    %1616 = vadd.xlane.f32.xlu0 %v1615
    %v1617 = vpop.xlane.xlu0 %1616
    %v1618 = vrsqrt.pop %v1617
    %v1619 = vmul.f32 %v1618, %v1617
    %v1620 = vmul.f32 %v1619, %v1618
    %v1621 = vmul.f32 0.5, %v1620
    %v1622 = vsub.f32 1.5, %v1621
    %v1623 = vmul.f32 %v1618, %v1622
    %v1624 = vmul.f32 %v1617, %v1623
    %vm1625 = vcmp.eq.f32.partialorder %v1617, inf
    %v1626 = vsel %vm1625, %v1617, %v1624
    %vm1627 = vcmp.eq.f32.partialorder %v1617, 0.0
    %v1628 = vand.u32 %v1617, 2147483648
    %v1629 = vsel %vm1627, %v1628, %v1626
    %1631 = vrot.lane.b32.xlu0 %v1573, 120
    %v1632 = vpop.permute.xlu0 %1631
    %v1634 = vmul.f32 %v1555, %v1632
    %v1635 = vsel %vm1557, %v1634, 0.0
    %1636 = vadd.xlane.f32.xlu0 %v1635
    %v1637 = vpop.xlane.xlu0 %1636
    %v1638 = vmul.f32 %v1572, %v1629
    %v1639 = vmax.f32 %v1638, 1e-06
    %v1640 = vrcp.pop %v1639
    %v1641 = vmul.f32 %v1639, %v1640
    %v1642 = vsub.f32 1.0, %v1641
    %v1643 = vmul.f32 %v1640, %v1642
    %v1644 = vadd.f32 %v1640, %v1643
    %vm1645 = vweird.f32 %v1639
    %vm1646 = vweird.f32 %v1640
    %vm1647 = vmor %vm1645, %vm1646
    %v1648 = vsel %vm1647, %v1640, %v1644
    %v1649 = vand.u32 2147483647, %v1639
    %vm1650 = vcmp.eq.f32.partialorder %v1649, 8.507059e+37
    %v1651 = vand.u32 %v1639, 2147483648
    %v1652 = vor.u32 1.1754944e-38, %v1651
    %v1653 = vsel %vm1650, %v1652, %v1648
    %v1654 = vmul.f32 %v1637, %v1653
    %1655 = vrot.lane.b32.xlu0 %v1574, 112
    %v1656 = vpop.permute.xlu0 %1655
    %v1658 = vsel %vm1557, %v1656, 0.0
    %1659 = vadd.xlane.f32.xlu0 %v1658
    %v1660 = vpop.xlane.xlu0 %1659
    %v1661 = vrsqrt.pop %v1660
    %v1662 = vmul.f32 %v1661, %v1660
    %v1663 = vmul.f32 %v1662, %v1661
    %v1664 = vmul.f32 0.5, %v1663
    %v1665 = vsub.f32 1.5, %v1664
    %v1666 = vmul.f32 %v1661, %v1665
    %v1667 = vmul.f32 %v1660, %v1666
    %vm1668 = vcmp.eq.f32.partialorder %v1660, inf
    %v1669 = vsel %vm1668, %v1660, %v1667
    %vm1670 = vcmp.eq.f32.partialorder %v1660, 0.0
    %v1671 = vand.u32 %v1660, 2147483648
    %v1672 = vsel %vm1670, %v1671, %v1669
    %1673 = vrot.lane.b32.xlu0 %v1573, 112
    %v1674 = vpop.permute.xlu0 %1673
    %v1676 = vmul.f32 %v1555, %v1674
    %v1677 = vsel %vm1557, %v1676, 0.0
    %1678 = vadd.xlane.f32.xlu0 %v1677
    %v1679 = vpop.xlane.xlu0 %1678
    %v1680 = vmul.f32 %v1572, %v1672
    %v1681 = vmax.f32 %v1680, 1e-06
    %v1682 = vrcp.pop %v1681
    %v1683 = vmul.f32 %v1681, %v1682
    %v1684 = vsub.f32 1.0, %v1683
    %v1685 = vmul.f32 %v1682, %v1684
    %v1686 = vadd.f32 %v1682, %v1685
    %vm1687 = vweird.f32 %v1681
    %vm1688 = vweird.f32 %v1682
    %vm1689 = vmor %vm1687, %vm1688
    %v1690 = vsel %vm1689, %v1682, %v1686
    %v1691 = vand.u32 2147483647, %v1681
    %vm1692 = vcmp.eq.f32.partialorder %v1691, 8.507059e+37
    %v1693 = vand.u32 %v1681, 2147483648
    %v1694 = vor.u32 1.1754944e-38, %v1693
    %v1695 = vsel %vm1692, %v1694, %v1690
    %v1696 = vmul.f32 %v1679, %v1695
    %1697 = vrot.lane.b32.xlu0 %v1574, 104
    %v1698 = vpop.permute.xlu0 %1697
    %v1700 = vsel %vm1557, %v1698, 0.0
    %1701 = vadd.xlane.f32.xlu0 %v1700
    %v1702 = vpop.xlane.xlu0 %1701
    %v1703 = vrsqrt.pop %v1702
    %v1704 = vmul.f32 %v1703, %v1702
    %v1705 = vmul.f32 %v1704, %v1703
    %v1706 = vmul.f32 0.5, %v1705
    %v1707 = vsub.f32 1.5, %v1706
    %v1708 = vmul.f32 %v1703, %v1707
    %v1709 = vmul.f32 %v1702, %v1708
    %vm1710 = vcmp.eq.f32.partialorder %v1702, inf
    %v1711 = vsel %vm1710, %v1702, %v1709
    %vm1712 = vcmp.eq.f32.partialorder %v1702, 0.0
    %v1713 = vand.u32 %v1702, 2147483648
    %v1714 = vsel %vm1712, %v1713, %v1711
    %1715 = vrot.lane.b32.xlu0 %v1573, 104
    %v1716 = vpop.permute.xlu0 %1715
    %v1718 = vmul.f32 %v1555, %v1716
    %v1719 = vsel %vm1557, %v1718, 0.0
    %1720 = vadd.xlane.f32.xlu0 %v1719
    %v1721 = vpop.xlane.xlu0 %1720
    %v1722 = vmul.f32 %v1572, %v1714
    %v1723 = vmax.f32 %v1722, 1e-06
    %v1724 = vrcp.pop %v1723
    %v1725 = vmul.f32 %v1723, %v1724
    %v1726 = vsub.f32 1.0, %v1725
    %v1727 = vmul.f32 %v1724, %v1726
    %v1728 = vadd.f32 %v1724, %v1727
    %vm1729 = vweird.f32 %v1723
    %vm1730 = vweird.f32 %v1724
    %vm1731 = vmor %vm1729, %vm1730
    %v1732 = vsel %vm1731, %v1724, %v1728
    %v1733 = vand.u32 2147483647, %v1723
    %vm1734 = vcmp.eq.f32.partialorder %v1733, 8.507059e+37
    %v1735 = vand.u32 %v1723, 2147483648
    %v1736 = vor.u32 1.1754944e-38, %v1735
    %v1737 = vsel %vm1734, %v1736, %v1732
    %v1738 = vmul.f32 %v1721, %v1737
    %1739 = vrot.lane.b32.xlu0 %v1574, 96
    %v1740 = vpop.permute.xlu0 %1739
    %v1742 = vsel %vm1557, %v1740, 0.0
    %1743 = vadd.xlane.f32.xlu0 %v1742
    %v1744 = vpop.xlane.xlu0 %1743
    %v1745 = vrsqrt.pop %v1744
    %v1746 = vmul.f32 %v1745, %v1744
    %v1747 = vmul.f32 %v1746, %v1745
    %v1748 = vmul.f32 0.5, %v1747
    %v1749 = vsub.f32 1.5, %v1748
    %v1750 = vmul.f32 %v1745, %v1749
    %v1751 = vmul.f32 %v1744, %v1750
    %vm1752 = vcmp.eq.f32.partialorder %v1744, inf
    %v1753 = vsel %vm1752, %v1744, %v1751
    %vm1754 = vcmp.eq.f32.partialorder %v1744, 0.0
    %v1755 = vand.u32 %v1744, 2147483648
    %v1756 = vsel %vm1754, %v1755, %v1753
    %1757 = vrot.lane.b32.xlu0 %v1573, 96
    %v1758 = vpop.permute.xlu0 %1757
    %v1760 = vmul.f32 %v1555, %v1758
    %v1761 = vsel %vm1557, %v1760, 0.0
    %1762 = vadd.xlane.f32.xlu0 %v1761
    %v1763 = vpop.xlane.xlu0 %1762
    %v1764 = vmul.f32 %v1572, %v1756
    %v1765 = vmax.f32 %v1764, 1e-06
    %v1766 = vrcp.pop %v1765
    %v1767 = vmul.f32 %v1765, %v1766
    %v1768 = vsub.f32 1.0, %v1767
    %v1769 = vmul.f32 %v1766, %v1768
    %v1770 = vadd.f32 %v1766, %v1769
    %vm1771 = vweird.f32 %v1765
    %vm1772 = vweird.f32 %v1766
    %vm1773 = vmor %vm1771, %vm1772
    %v1774 = vsel %vm1773, %v1766, %v1770
    %v1775 = vand.u32 2147483647, %v1765
    %vm1776 = vcmp.eq.f32.partialorder %v1775, 8.507059e+37
    %v1777 = vand.u32 %v1765, 2147483648
    %v1778 = vor.u32 1.1754944e-38, %v1777
    %v1779 = vsel %vm1776, %v1778, %v1774
    %v1780 = vmul.f32 %v1763, %v1779
    %vm1781 = vcmask 7168
    %v1782 = vsel %vm1781, %v1610, %v1654
    %vm1783 = vcmask 15360
    %v1784 = vsel %vm1783, %v1782, %v1696
    %vm1785 = vcmask 23552
    %v1786 = vsel %vm1785, %v1784, %v1738
    %vm1787 = vcmask 31744
    %v1788 = vsel %vm1787, %v1786, %v1780
    %vm1789 = vcmask 33792
    %v1790 = vsel %vm1789, %v1788, -inf
    %1791 = vmax.xlane.f32.xlu0 %v1790
    %v1792 = vpop.xlane.xlu0 %1791
    %v1793 = vsub.f32 %v1788, %v1792
    %v1794 = vmul.f32 %v1793, 1.442695
    %v1795 = vpow.pop %v1794
    %v1796 = vsel %vm1789, %v1795, 0.0
    %1797 = vadd.xlane.f32.xlu0 %v1796
    %v1798 = vpop.xlane.xlu0 %1797
    %v1799 = vrcp.pop %v1798
    %v1800 = vmul.f32 %v1798, %v1799
    %v1801 = vsub.f32 1.0, %v1800
    %v1802 = vmul.f32 %v1799, %v1801
    %v1803 = vadd.f32 %v1799, %v1802
    %vm1804 = vweird.f32 %v1798
    %vm1805 = vweird.f32 %v1799
    %vm1806 = vmor %vm1804, %vm1805
    %v1807 = vsel %vm1806, %v1799, %v1803
    %v1808 = vand.u32 2147483647, %v1798
    %vm1809 = vcmp.eq.f32.partialorder %v1808, 8.507059e+37
    %v1810 = vand.u32 %v1798, 2147483648
    %v1811 = vor.u32 1.1754944e-38, %v1810
    %v1812 = vsel %vm1809, %v1811, %v1807
    %v1813 = vmul.f32 %v1795, %v1812
    %1815 = vset.pattern.permute.xlu0 0
    %1816 = vperm.xlu0 %1815, %v1813
    %v1817 = vpop.permute.xlu0 %1816
    %v1819 = vmul.f32 %v1817, %v1573
    %1820 = vset.pattern.permute.xlu0 1
    %1821 = vperm.xlu0 %1820, %v1813
    %v1822 = vpop.permute.xlu0 %1821
    %v1824 = vmul.f32 %v1822, %v1573
    %1826 = vrot.lane.b32.xlu0 %v1824, 120
    %v1827 = vpop.permute.xlu0 %1826
    %v1829 = vadd.f32 %v1819, %v1827
    %1830 = vset.pattern.permute.xlu0 2
    %1831 = vperm.xlu0 %1830, %v1813
    %v1832 = vpop.permute.xlu0 %1831
    %v1834 = vmul.f32 %v1832, %v1573
    %1836 = vrot.lane.b32.xlu0 %v1834, 112
    %v1837 = vpop.permute.xlu0 %1836
    %v1839 = vadd.f32 %v1829, %v1837
    %1840 = vset.pattern.permute.xlu0 3
    %1841 = vperm.xlu0 %1840, %v1813
    %v1842 = vpop.permute.xlu0 %1841
    %v1844 = vmul.f32 %v1842, %v1573
    %1846 = vrot.lane.b32.xlu0 %v1844, 104
    %v1847 = vpop.permute.xlu0 %1846
    %v1849 = vadd.f32 %v1839, %v1847
    %1850 = vset.pattern.permute.xlu0 4
    %1851 = vperm.xlu0 %1850, %v1813
    %v1852 = vpop.permute.xlu0 %1851
    %v1854 = vmul.f32 %v1852, %v1573
    %1856 = vrot.lane.b32.xlu0 %v1854, 96
    %v1857 = vpop.permute.xlu0 %1856
    %v1859 = vadd.f32 %v1849, %v1857
    %1861 = vrot.lane.b32.xlu0 %v1859, 32
    %v1862 = vpop.permute.xlu0 %1861
    %v1864 = vsel %vm1159, %v1554, %v1862
    %vm1865 = vcmask 326656
    %v1866 = vsel %vm1865, %v1864, 1.0
    %v1867 = vld [vmem:[#allocation2 + $0x268] sm:$0x1]
    %v1868 = vperm.slane %v1867, 0
    %v1869 = vmul.f32 %v1866, %v1868
    %vm1870 = vcmask 328704
    %v1871 = vsel %vm1870, %v1869, 0.0
    %1872 = vadd.xlane.f32.xlu0 %v1871
    %v1873 = vpop.xlane.xlu0 %1872
    %v1874 = vxor.u32 %v1873, 2147483648
    %v1875 = vmul.f32 %v1874, 1.442695
    %v1876 = vpow.pop %v1875
    %v1877 = vadd.f32 %v1876, 1.0
    %v1878 = vrcp.pop %v1877
    %v1879 = vmul.f32 %v1877, %v1878
    %v1880 = vsub.f32 1.0, %v1879
    %v1881 = vmul.f32 %v1878, %v1880
    %v1882 = vadd.f32 %v1878, %v1881
    %vm1883 = vweird.f32 %v1877
    %vm1884 = vweird.f32 %v1878
    %vm1885 = vmor %vm1883, %vm1884
    %v1886 = vsel %vm1885, %v1878, %v1882
    %v1887 = vand.u32 2147483647, %v1877
    %vm1888 = vcmp.eq.f32.partialorder %v1887, 8.507059e+37
    %v1889 = vand.u32 %v1877, 2147483648
    %v1890 = vor.u32 1.1754944e-38, %v1889
    %v1891 = vsel %vm1888, %v1890, %v1886
    %v1892 = vmul.f32 1.0, %v1891
    %vm1893 = vcmask 1024
    %1894 = vst.msk [vmem:[%s3] sm:$0x3] %vm1893, %v1892
    // Predicated region
    $region18: #{lstm_tdm_forward.1} parent=1 // pred_check
      _
    $region19: #{lstm_tdm_forward.1} parent=1 // pred_check_branch
      %1896 = sbr.rel (0) target = $region21
    $region20: #{lstm_tdm_forward.1} parent=1 // pred_region
      _
    $region21: #{lstm_tdm_forward.1} parent=1 // pred_fallthru
      _
    // Predicated region
    $region22: #{lstm_tdm_forward.1} parent=1 // pred_check
      _
    $region23: #{lstm_tdm_forward.1} parent=1 // pred_check_branch
      %1898 = sbr.rel (0) target = $region25
    $region24: #{lstm_tdm_forward.1} parent=1 // pred_region
      _
    $region25: #{lstm_tdm_forward.1} parent=1 // pred_fallthru
      _
    %1899 = vsyncpa [#allocation3], 1

</llo_original>
